<compile_context>
chip_gen: v7x
topology: tpu7x:2x2x1
jax: 0.10.0
libtpu: 0.0.40
codegen_flags: <defaults>
</compile_context>

<pallas_src>
import numpy as np

import jax
import jax.numpy as jnp
from jax.experimental import pallas as pl
from jax.experimental.pallas import tpu as pltpu  # noqa: F401  (kept for TPU-target clarity)


# ----------------------------- fused Pallas kernel --------------------------- #

def _decoder_kernel(x_ref, *refs):
    """All 5 decoder stages for the whole (batch-folded) input, entirely in VMEM.

    x_ref : (C0*H0, N*W0) bf16      input slab, row = c*H0 + h, col = n*W0 + w
    refs  : S x mw (3, N*W, N*W2)   bf16 width interp(+pad), block-diag over batch,
                                     one kw tap per leading index
            S x g  (Cout*H2, 3*Cin*H) bf16 collapsed (conv x height-interp x pad)
                                     operator, kw taps concatenated on columns
            S x b  (Cout*H2, N*W2)  f32 folded bias, pre-broadcast lane-dense
            o_ref  (3*H_out, N*W_out) f32 output slab
    """
    n_stages = (len(refs) - 1) // 3
    mw_refs = refs[0:n_stages]
    g_refs = refs[n_stages:2 * n_stages]
    b_refs = refs[2 * n_stages:3 * n_stages]
    o_ref = refs[3 * n_stages]

    x = x_ref[...]                                            # (Cin*H, N*W) bf16
    for s in range(n_stages):
        # Width interp + zero-pad + kw tap: one tiny bf16 matmul per tap.
        taps = [
            jnp.dot(x, mw_refs[s][dw],
                    preferred_element_type=jnp.float32).astype(jnp.bfloat16)
            for dw in range(3)
        ]
        ucat = jnp.concatenate(taps, axis=0)                  # (3*Cin*H, N*W2) bf16
        # Collapsed conv/height operator: single K = 3*Cin*H matmul, f32 accumulate.
        y = jnp.dot(g_refs[s][...], ucat,
                    preferred_element_type=jnp.float32)       # (Cout*H2, N*W2) f32
        y = y + b_refs[s][...]                                # lane-dense bias add (f32)
        if s < n_stages - 1:
            x = jnp.maximum(y, 0.0).astype(jnp.bfloat16)      # ReLU, feed next stage
        else:
            o_ref[...] = y                                    # last stage: no BN/ReLU


def _run_decoder(x2, prep):
    mws, gs, bs = prep["mw"], prep["g"], prep["b"]
    out_rows = gs[-1].shape[0]          # 3 * H_out
    out_cols = bs[-1].shape[1]          # N * W_out
    # Single invocation, no grid: every operand lives fully in VMEM (~0.5 MiB),
    # output store is lane-dense (last dim = N*W_out = 128).
    return pl.pallas_call(
        _decoder_kernel,
        out_shape=jax.ShapeDtypeStruct((out_rows, out_cols), jnp.float32),
    )(x2, *mws, *gs, *bs)


# -------------------- operator-matrix preparation (host) --------------------- #

def _interp_matrix(n_in):
    """(2*n_in, n_in) bilinear interpolation matrix, scale=2, align_corners=True."""
    n_out = 2 * n_in
    if n_in == 1:
        return np.ones((n_out, 1), np.float32)
    src = np.arange(n_out, dtype=np.float64) * (n_in - 1) / (n_out - 1)
    lo = np.clip(np.floor(src).astype(np.int64), 0, n_in - 2)
    frac = (src - lo).astype(np.float32)
    m = np.zeros((n_out, n_in), np.float32)
    rows = np.arange(n_out)
    m[rows, lo] += 1.0 - frac
    m[rows, lo + 1] += frac
    return m


def _padded_interp(n_in):
    """Interp matrix with zero first/last rows (= the conv's zero padding)."""
    return np.pad(_interp_matrix(n_in), ((1, 1), (0, 0)))


def init_decoder_params(planes, key):
    """PyTorch-like params: conv weights (Cout,Cin,3,3), eval-mode BN, conv5 bias."""
    chans = [planes, planes // 2, planes // 4, planes // 8, planes // 16, 3]
    params = []
    for i in range(5):
        cin, cout = chans[i], chans[i + 1]
        key, wkey = jax.random.split(key)
        fan_in = cin * 9
        w = jax.random.normal(wkey, (cout, cin, 3, 3), jnp.float32) * (2.0 / fan_in) ** 0.5
        if i < 4:
            bn = dict(gamma=jnp.ones((cout,), jnp.float32),
                      beta=jnp.zeros((cout,), jnp.float32),
                      mean=jnp.zeros((cout,), jnp.float32),
                      var=jnp.ones((cout,), jnp.float32))
            params.append(dict(w=w, bn=bn, bias=None))
        else:
            key, bkey = jax.random.split(key)
            bound = 1.0 / (fan_in ** 0.5)
            bias = jax.random.uniform(bkey, (cout,), jnp.float32, -bound, bound)
            params.append(dict(w=w, bn=None, bias=bias))
    return params


def prepare_decoder(params, h0, w0, n_batch, eps=1e-5):
    """Precompute kernel-ready bf16 operators once; forward pass = one pallas_call.

    Per stage:
      mw (3, N*W, N*W2)       : width interp(+pad, +kw tap), block-diag over batch
      g  (Cout*H2, 3*Cin*H)   : sum_dh kron(w_fold[:,:,dh,dw], mh_p[dh:dh+H2]),
                                kw taps concatenated on the contraction axis
      b  (Cout*H2, N*W2) f32  : folded bias, pre-broadcast to lane-dense slab
    """
    mw_list, g_list, b_list = [], [], []
    h, w = h0, w0
    for p in params:
        wt = np.asarray(p["w"], np.float32)                    # (Cout, Cin, 3, 3)
        cout, cin = wt.shape[0], wt.shape[1]
        if p["bn"] is not None:
            scale = np.asarray(p["bn"]["gamma"]) / np.sqrt(np.asarray(p["bn"]["var"]) + eps)
            bias = np.asarray(p["bn"]["beta"]) - np.asarray(p["bn"]["mean"]) * scale
        else:
            scale = np.ones((cout,), np.float32)
            bias = np.asarray(p["bias"], np.float32)
        w_fold = wt * scale.reshape(cout, 1, 1, 1)             # fold BN scale into conv
        h2, w2 = 2 * h, 2 * w
        mh_p = _padded_interp(h)                               # (H2+2, H)
        mw_p = _padded_interp(w)                               # (W2+2, W)
        # Width operator per kw tap, block-diagonal over the folded batch.
        mw = np.stack([np.kron(np.eye(n_batch, dtype=np.float32), mw_p[dw:dw + w2].T)
                       for dw in range(3)])                    # (3, N*W, N*W2)
        # Kronecker-collapsed (conv weights x height interp x pad) operator.
        g = np.concatenate([
            sum(np.kron(w_fold[:, :, dh, dw], mh_p[dh:dh + h2]) for dh in range(3))
            for dw in range(3)], axis=1)                       # (Cout*H2, 3*Cin*H)
        b2 = np.repeat(bias.astype(np.float32), h2).reshape(cout * h2, 1)
        b2 = np.ascontiguousarray(np.broadcast_to(b2, (cout * h2, n_batch * w2)))
        mw_list.append(jnp.asarray(mw, jnp.bfloat16))
        g_list.append(jnp.asarray(g, jnp.bfloat16))
        b_list.append(jnp.asarray(b2, jnp.float32))
        h, w = h2, w2
    return dict(mw=mw_list, g=g_list, b=b_list)


def decoder_forward(x_nchw, prep):
    """x_nchw: (N, planes, H, W) -> (N, 3, 32*H, 32*W), like Decoder.forward (eval)."""
    n, c, h, w = x_nchw.shape
    # Slab layout: row = c*H + h, col = n*W + w  (batch folded onto the lane axis).
    x2 = jnp.transpose(x_nchw, (1, 2, 0, 3)).reshape(c * h, n * w).astype(jnp.bfloat16)
    out2 = _run_decoder(x2, prep)                              # (3*H_out, N*W_out) f32
    h_out = out2.shape[0] // 3
    w_out = out2.shape[1] // n
    return out2.reshape(3, h_out, n, w_out).transpose(2, 0, 1, 3)


# ------------------------------------ Main ------------------------------------ #

if __name__ == "__main__":
    key = jax.random.PRNGKey(0)
    planes = 32            # channels: 32 -> 16 -> 8 -> 4 -> 2 -> 3
    n, h, w = 2, 2, 2      # spatial:  2 -> 4 -> 8 -> 16 -> 32 -> 64

    key, xkey, pkey = jax.random.split(key, 3)
    x = jax.random.normal(xkey, (n, planes, h, w), jnp.float32)
    params = init_decoder_params(planes, pkey)
    prep = prepare_decoder(params, h, w, n)

    out = jax.jit(decoder_forward)(x, prep)
    out = jax.block_until_ready(out)
    assert out.shape == (n, 3, h * 32, w * 32), out.shape
    print("KERNEL_OK")
</pallas_src>

<mosaic_0001>
module attributes {stable_mosaic.version = 11 : i64} {
  func.func @_decoder_kernel(%arg0: memref<64x4xbf16, #tpu.memory_space<vmem>>, %arg1: memref<3x4x8xbf16, #tpu.memory_space<vmem>>, %arg2: memref<3x8x16xbf16, #tpu.memory_space<vmem>>, %arg3: memref<3x16x32xbf16, #tpu.memory_space<vmem>>, %arg4: memref<3x32x64xbf16, #tpu.memory_space<vmem>>, %arg5: memref<3x64x128xbf16, #tpu.memory_space<vmem>>, %arg6: memref<64x192xbf16, #tpu.memory_space<vmem>>, %arg7: memref<64x192xbf16, #tpu.memory_space<vmem>>, %arg8: memref<64x192xbf16, #tpu.memory_space<vmem>>, %arg9: memref<64x192xbf16, #tpu.memory_space<vmem>>, %arg10: memref<192x192xbf16, #tpu.memory_space<vmem>>, %arg11: memref<64x8xf32, #tpu.memory_space<vmem>>, %arg12: memref<64x16xf32, #tpu.memory_space<vmem>>, %arg13: memref<64x32xf32, #tpu.memory_space<vmem>>, %arg14: memref<64x64xf32, #tpu.memory_space<vmem>>, %arg15: memref<192x128xf32, #tpu.memory_space<vmem>>, %arg16: memref<192x128xf32, #tpu.memory_space<vmem>>) attributes {dimension_semantics = [], scalar_prefetch = 0 : i64, scratch_operands = 0 : i64, tpu.core_type = #tpu.core_type<tc>} {
    %c0 = arith.constant 0 : index
    %c0_0 = arith.constant 0 : index
    %0 = vector.load %arg0[%c0, %c0_0] : memref<64x4xbf16, #tpu.memory_space<vmem>>, vector<64x4xbf16>
    %c0_1 = arith.constant 0 : index
    %c0_2 = arith.constant 0 : index
    %c0_3 = arith.constant 0 : index
    %1 = vector.load %arg1[%c0_1, %c0_2, %c0_3] : memref<3x4x8xbf16, #tpu.memory_space<vmem>>, vector<1x4x8xbf16>
    %2 = vector.shape_cast %1 : vector<1x4x8xbf16> to vector<4x8xbf16>
    %cst = arith.constant dense<0.000000e+00> : vector<64x8xf32>
    %3 = tpu.matmul %0, %2, %cst {dimension_numbers = #tpu.dot_dimension_numbers<[1], [0], [0], [1], [0, 0, 1, 1], [], []>} : vector<64x4xbf16>, vector<4x8xbf16>, vector<64x8xf32> -> vector<64x8xf32>
    %4 = arith.truncf %3 : vector<64x8xf32> to vector<64x8xbf16>
    %c1 = arith.constant 1 : index
    %c0_4 = arith.constant 0 : index
    %c0_5 = arith.constant 0 : index
    %5 = vector.load %arg1[%c1, %c0_4, %c0_5] : memref<3x4x8xbf16, #tpu.memory_space<vmem>>, vector<1x4x8xbf16>
    %6 = vector.shape_cast %5 : vector<1x4x8xbf16> to vector<4x8xbf16>
    %cst_6 = arith.constant dense<0.000000e+00> : vector<64x8xf32>
    %7 = tpu.matmul %0, %6, %cst_6 {dimension_numbers = #tpu.dot_dimension_numbers<[1], [0], [0], [1], [0, 0, 1, 1], [], []>} : vector<64x4xbf16>, vector<4x8xbf16>, vector<64x8xf32> -> vector<64x8xf32>
    %8 = arith.truncf %7 : vector<64x8xf32> to vector<64x8xbf16>
    %c2 = arith.constant 2 : index
    %c0_7 = arith.constant 0 : index
    %c0_8 = arith.constant 0 : index
    %9 = vector.load %arg1[%c2, %c0_7, %c0_8] : memref<3x4x8xbf16, #tpu.memory_space<vmem>>, vector<1x4x8xbf16>
    %10 = vector.shape_cast %9 : vector<1x4x8xbf16> to vector<4x8xbf16>
    %cst_9 = arith.constant dense<0.000000e+00> : vector<64x8xf32>
    %11 = tpu.matmul %0, %10, %cst_9 {dimension_numbers = #tpu.dot_dimension_numbers<[1], [0], [0], [1], [0, 0, 1, 1], [], []>} : vector<64x4xbf16>, vector<4x8xbf16>, vector<64x8xf32> -> vector<64x8xf32>
    %12 = arith.truncf %11 : vector<64x8xf32> to vector<64x8xbf16>
    %13 = tpu.concatenate %4, %8, %12 in 0 : vector<64x8xbf16>, vector<64x8xbf16>, vector<64x8xbf16> -> vector<192x8xbf16>
    %c0_10 = arith.constant 0 : index
    %c0_11 = arith.constant 0 : index
    %14 = vector.load %arg6[%c0_10, %c0_11] : memref<64x192xbf16, #tpu.memory_space<vmem>>, vector<64x192xbf16>
    %cst_12 = arith.constant dense<0.000000e+00> : vector<64x8xf32>
    %15 = tpu.matmul %14, %13, %cst_12 {dimension_numbers = #tpu.dot_dimension_numbers<[1], [0], [0], [1], [0, 0, 1, 1], [], []>} : vector<64x192xbf16>, vector<192x8xbf16>, vector<64x8xf32> -> vector<64x8xf32>
    %c0_13 = arith.constant 0 : index
    %c0_14 = arith.constant 0 : index
    %16 = vector.load %arg11[%c0_13, %c0_14] : memref<64x8xf32, #tpu.memory_space<vmem>>, vector<64x8xf32>
    %17 = arith.addf %15, %16 : vector<64x8xf32>
    %cst_15 = arith.constant 0.000000e+00 : f32
    %18 = vector.broadcast %cst_15 : f32 to vector<64x8xf32>
    %19 = arith.maximumf %17, %18 : vector<64x8xf32>
    %20 = arith.truncf %19 : vector<64x8xf32> to vector<64x8xbf16>
    %c0_16 = arith.constant 0 : index
    %c0_17 = arith.constant 0 : index
    %c0_18 = arith.constant 0 : index
    %21 = vector.load %arg2[%c0_16, %c0_17, %c0_18] : memref<3x8x16xbf16, #tpu.memory_space<vmem>>, vector<1x8x16xbf16>
    %22 = vector.shape_cast %21 : vector<1x8x16xbf16> to vector<8x16xbf16>
    %cst_19 = arith.constant dense<0.000000e+00> : vector<64x16xf32>
    %23 = tpu.matmul %20, %22, %cst_19 {dimension_numbers = #tpu.dot_dimension_numbers<[1], [0], [0], [1], [0, 0, 1, 1], [], []>} : vector<64x8xbf16>, vector<8x16xbf16>, vector<64x16xf32> -> vector<64x16xf32>
    %24 = arith.truncf %23 : vector<64x16xf32> to vector<64x16xbf16>
    %c1_20 = arith.constant 1 : index
    %c0_21 = arith.constant 0 : index
    %c0_22 = arith.constant 0 : index
    %25 = vector.load %arg2[%c1_20, %c0_21, %c0_22] : memref<3x8x16xbf16, #tpu.memory_space<vmem>>, vector<1x8x16xbf16>
    %26 = vector.shape_cast %25 : vector<1x8x16xbf16> to vector<8x16xbf16>
    %cst_23 = arith.constant dense<0.000000e+00> : vector<64x16xf32>
    %27 = tpu.matmul %20, %26, %cst_23 {dimension_numbers = #tpu.dot_dimension_numbers<[1], [0], [0], [1], [0, 0, 1, 1], [], []>} : vector<64x8xbf16>, vector<8x16xbf16>, vector<64x16xf32> -> vector<64x16xf32>
    %28 = arith.truncf %27 : vector<64x16xf32> to vector<64x16xbf16>
    %c2_24 = arith.constant 2 : index
    %c0_25 = arith.constant 0 : index
    %c0_26 = arith.constant 0 : index
    %29 = vector.load %arg2[%c2_24, %c0_25, %c0_26] : memref<3x8x16xbf16, #tpu.memory_space<vmem>>, vector<1x8x16xbf16>
    %30 = vector.shape_cast %29 : vector<1x8x16xbf16> to vector<8x16xbf16>
    %cst_27 = arith.constant dense<0.000000e+00> : vector<64x16xf32>
    %31 = tpu.matmul %20, %30, %cst_27 {dimension_numbers = #tpu.dot_dimension_numbers<[1], [0], [0], [1], [0, 0, 1, 1], [], []>} : vector<64x8xbf16>, vector<8x16xbf16>, vector<64x16xf32> -> vector<64x16xf32>
    %32 = arith.truncf %31 : vector<64x16xf32> to vector<64x16xbf16>
    %33 = tpu.concatenate %24, %28, %32 in 0 : vector<64x16xbf16>, vector<64x16xbf16>, vector<64x16xbf16> -> vector<192x16xbf16>
    %c0_28 = arith.constant 0 : index
    %c0_29 = arith.constant 0 : index
    %34 = vector.load %arg7[%c0_28, %c0_29] : memref<64x192xbf16, #tpu.memory_space<vmem>>, vector<64x192xbf16>
    %cst_30 = arith.constant dense<0.000000e+00> : vector<64x16xf32>
    %35 = tpu.matmul %34, %33, %cst_30 {dimension_numbers = #tpu.dot_dimension_numbers<[1], [0], [0], [1], [0, 0, 1, 1], [], []>} : vector<64x192xbf16>, vector<192x16xbf16>, vector<64x16xf32> -> vector<64x16xf32>
    %c0_31 = arith.constant 0 : index
    %c0_32 = arith.constant 0 : index
    %36 = vector.load %arg12[%c0_31, %c0_32] : memref<64x16xf32, #tpu.memory_space<vmem>>, vector<64x16xf32>
    %37 = arith.addf %35, %36 : vector<64x16xf32>
    %cst_33 = arith.constant 0.000000e+00 : f32
    %38 = vector.broadcast %cst_33 : f32 to vector<64x16xf32>
    %39 = arith.maximumf %37, %38 : vector<64x16xf32>
    %40 = arith.truncf %39 : vector<64x16xf32> to vector<64x16xbf16>
    %c0_34 = arith.constant 0 : index
    %c0_35 = arith.constant 0 : index
    %c0_36 = arith.constant 0 : index
    %41 = vector.load %arg3[%c0_34, %c0_35, %c0_36] : memref<3x16x32xbf16, #tpu.memory_space<vmem>>, vector<1x16x32xbf16>
    %42 = vector.shape_cast %41 : vector<1x16x32xbf16> to vector<16x32xbf16>
    %cst_37 = arith.constant dense<0.000000e+00> : vector<64x32xf32>
    %43 = tpu.matmul %40, %42, %cst_37 {dimension_numbers = #tpu.dot_dimension_numbers<[1], [0], [0], [1], [0, 0, 1, 1], [], []>} : vector<64x16xbf16>, vector<16x32xbf16>, vector<64x32xf32> -> vector<64x32xf32>
    %44 = arith.truncf %43 : vector<64x32xf32> to vector<64x32xbf16>
    %c1_38 = arith.constant 1 : index
    %c0_39 = arith.constant 0 : index
    %c0_40 = arith.constant 0 : index
    %45 = vector.load %arg3[%c1_38, %c0_39, %c0_40] : memref<3x16x32xbf16, #tpu.memory_space<vmem>>, vector<1x16x32xbf16>
    %46 = vector.shape_cast %45 : vector<1x16x32xbf16> to vector<16x32xbf16>
    %cst_41 = arith.constant dense<0.000000e+00> : vector<64x32xf32>
    %47 = tpu.matmul %40, %46, %cst_41 {dimension_numbers = #tpu.dot_dimension_numbers<[1], [0], [0], [1], [0, 0, 1, 1], [], []>} : vector<64x16xbf16>, vector<16x32xbf16>, vector<64x32xf32> -> vector<64x32xf32>
    %48 = arith.truncf %47 : vector<64x32xf32> to vector<64x32xbf16>
    %c2_42 = arith.constant 2 : index
    %c0_43 = arith.constant 0 : index
    %c0_44 = arith.constant 0 : index
    %49 = vector.load %arg3[%c2_42, %c0_43, %c0_44] : memref<3x16x32xbf16, #tpu.memory_space<vmem>>, vector<1x16x32xbf16>
    %50 = vector.shape_cast %49 : vector<1x16x32xbf16> to vector<16x32xbf16>
    %cst_45 = arith.constant dense<0.000000e+00> : vector<64x32xf32>
    %51 = tpu.matmul %40, %50, %cst_45 {dimension_numbers = #tpu.dot_dimension_numbers<[1], [0], [0], [1], [0, 0, 1, 1], [], []>} : vector<64x16xbf16>, vector<16x32xbf16>, vector<64x32xf32> -> vector<64x32xf32>
    %52 = arith.truncf %51 : vector<64x32xf32> to vector<64x32xbf16>
    %53 = tpu.concatenate %44, %48, %52 in 0 : vector<64x32xbf16>, vector<64x32xbf16>, vector<64x32xbf16> -> vector<192x32xbf16>
    %c0_46 = arith.constant 0 : index
    %c0_47 = arith.constant 0 : index
    %54 = vector.load %arg8[%c0_46, %c0_47] : memref<64x192xbf16, #tpu.memory_space<vmem>>, vector<64x192xbf16>
    %cst_48 = arith.constant dense<0.000000e+00> : vector<64x32xf32>
    %55 = tpu.matmul %54, %53, %cst_48 {dimension_numbers = #tpu.dot_dimension_numbers<[1], [0], [0], [1], [0, 0, 1, 1], [], []>} : vector<64x192xbf16>, vector<192x32xbf16>, vector<64x32xf32> -> vector<64x32xf32>
    %c0_49 = arith.constant 0 : index
    %c0_50 = arith.constant 0 : index
    %56 = vector.load %arg13[%c0_49, %c0_50] : memref<64x32xf32, #tpu.memory_space<vmem>>, vector<64x32xf32>
    %57 = arith.addf %55, %56 : vector<64x32xf32>
    %cst_51 = arith.constant 0.000000e+00 : f32
    %58 = vector.broadcast %cst_51 : f32 to vector<64x32xf32>
    %59 = arith.maximumf %57, %58 : vector<64x32xf32>
    %60 = arith.truncf %59 : vector<64x32xf32> to vector<64x32xbf16>
    %c0_52 = arith.constant 0 : index
    %c0_53 = arith.constant 0 : index
    %c0_54 = arith.constant 0 : index
    %61 = vector.load %arg4[%c0_52, %c0_53, %c0_54] : memref<3x32x64xbf16, #tpu.memory_space<vmem>>, vector<1x32x64xbf16>
    %62 = vector.shape_cast %61 : vector<1x32x64xbf16> to vector<32x64xbf16>
    %cst_55 = arith.constant dense<0.000000e+00> : vector<64x64xf32>
    %63 = tpu.matmul %60, %62, %cst_55 {dimension_numbers = #tpu.dot_dimension_numbers<[1], [0], [0], [1], [0, 0, 1, 1], [], []>} : vector<64x32xbf16>, vector<32x64xbf16>, vector<64x64xf32> -> vector<64x64xf32>
    %64 = arith.truncf %63 : vector<64x64xf32> to vector<64x64xbf16>
    %c1_56 = arith.constant 1 : index
    %c0_57 = arith.constant 0 : index
    %c0_58 = arith.constant 0 : index
    %65 = vector.load %arg4[%c1_56, %c0_57, %c0_58] : memref<3x32x64xbf16, #tpu.memory_space<vmem>>, vector<1x32x64xbf16>
    %66 = vector.shape_cast %65 : vector<1x32x64xbf16> to vector<32x64xbf16>
    %cst_59 = arith.constant dense<0.000000e+00> : vector<64x64xf32>
    %67 = tpu.matmul %60, %66, %cst_59 {dimension_numbers = #tpu.dot_dimension_numbers<[1], [0], [0], [1], [0, 0, 1, 1], [], []>} : vector<64x32xbf16>, vector<32x64xbf16>, vector<64x64xf32> -> vector<64x64xf32>
    %68 = arith.truncf %67 : vector<64x64xf32> to vector<64x64xbf16>
    %c2_60 = arith.constant 2 : index
    %c0_61 = arith.constant 0 : index
    %c0_62 = arith.constant 0 : index
    %69 = vector.load %arg4[%c2_60, %c0_61, %c0_62] : memref<3x32x64xbf16, #tpu.memory_space<vmem>>, vector<1x32x64xbf16>
    %70 = vector.shape_cast %69 : vector<1x32x64xbf16> to vector<32x64xbf16>
    %cst_63 = arith.constant dense<0.000000e+00> : vector<64x64xf32>
    %71 = tpu.matmul %60, %70, %cst_63 {dimension_numbers = #tpu.dot_dimension_numbers<[1], [0], [0], [1], [0, 0, 1, 1], [], []>} : vector<64x32xbf16>, vector<32x64xbf16>, vector<64x64xf32> -> vector<64x64xf32>
    %72 = arith.truncf %71 : vector<64x64xf32> to vector<64x64xbf16>
    %73 = tpu.concatenate %64, %68, %72 in 0 : vector<64x64xbf16>, vector<64x64xbf16>, vector<64x64xbf16> -> vector<192x64xbf16>
    %c0_64 = arith.constant 0 : index
    %c0_65 = arith.constant 0 : index
    %74 = vector.load %arg9[%c0_64, %c0_65] : memref<64x192xbf16, #tpu.memory_space<vmem>>, vector<64x192xbf16>
    %cst_66 = arith.constant dense<0.000000e+00> : vector<64x64xf32>
    %75 = tpu.matmul %74, %73, %cst_66 {dimension_numbers = #tpu.dot_dimension_numbers<[1], [0], [0], [1], [0, 0, 1, 1], [], []>} : vector<64x192xbf16>, vector<192x64xbf16>, vector<64x64xf32> -> vector<64x64xf32>
    %c0_67 = arith.constant 0 : index
    %c0_68 = arith.constant 0 : index
    %76 = vector.load %arg14[%c0_67, %c0_68] : memref<64x64xf32, #tpu.memory_space<vmem>>, vector<64x64xf32>
    %77 = arith.addf %75, %76 : vector<64x64xf32>
    %cst_69 = arith.constant 0.000000e+00 : f32
    %78 = vector.broadcast %cst_69 : f32 to vector<64x64xf32>
    %79 = arith.maximumf %77, %78 : vector<64x64xf32>
    %80 = arith.truncf %79 : vector<64x64xf32> to vector<64x64xbf16>
    %c0_70 = arith.constant 0 : index
    %c0_71 = arith.constant 0 : index
    %c0_72 = arith.constant 0 : index
    %81 = vector.load %arg5[%c0_70, %c0_71, %c0_72] : memref<3x64x128xbf16, #tpu.memory_space<vmem>>, vector<1x64x128xbf16>
    %82 = vector.shape_cast %81 : vector<1x64x128xbf16> to vector<64x128xbf16>
    %cst_73 = arith.constant dense<0.000000e+00> : vector<64x128xf32>
    %83 = tpu.matmul %80, %82, %cst_73 {dimension_numbers = #tpu.dot_dimension_numbers<[1], [0], [0], [1], [0, 0, 1, 1], [], []>} : vector<64x64xbf16>, vector<64x128xbf16>, vector<64x128xf32> -> vector<64x128xf32>
    %84 = arith.truncf %83 : vector<64x128xf32> to vector<64x128xbf16>
    %c1_74 = arith.constant 1 : index
    %c0_75 = arith.constant 0 : index
    %c0_76 = arith.constant 0 : index
    %85 = vector.load %arg5[%c1_74, %c0_75, %c0_76] : memref<3x64x128xbf16, #tpu.memory_space<vmem>>, vector<1x64x128xbf16>
    %86 = vector.shape_cast %85 : vector<1x64x128xbf16> to vector<64x128xbf16>
    %cst_77 = arith.constant dense<0.000000e+00> : vector<64x128xf32>
    %87 = tpu.matmul %80, %86, %cst_77 {dimension_numbers = #tpu.dot_dimension_numbers<[1], [0], [0], [1], [0, 0, 1, 1], [], []>} : vector<64x64xbf16>, vector<64x128xbf16>, vector<64x128xf32> -> vector<64x128xf32>
    %88 = arith.truncf %87 : vector<64x128xf32> to vector<64x128xbf16>
    %c2_78 = arith.constant 2 : index
    %c0_79 = arith.constant 0 : index
    %c0_80 = arith.constant 0 : index
    %89 = vector.load %arg5[%c2_78, %c0_79, %c0_80] : memref<3x64x128xbf16, #tpu.memory_space<vmem>>, vector<1x64x128xbf16>
    %90 = vector.shape_cast %89 : vector<1x64x128xbf16> to vector<64x128xbf16>
    %cst_81 = arith.constant dense<0.000000e+00> : vector<64x128xf32>
    %91 = tpu.matmul %80, %90, %cst_81 {dimension_numbers = #tpu.dot_dimension_numbers<[1], [0], [0], [1], [0, 0, 1, 1], [], []>} : vector<64x64xbf16>, vector<64x128xbf16>, vector<64x128xf32> -> vector<64x128xf32>
    %92 = arith.truncf %91 : vector<64x128xf32> to vector<64x128xbf16>
    %93 = tpu.concatenate %84, %88, %92 in 0 : vector<64x128xbf16>, vector<64x128xbf16>, vector<64x128xbf16> -> vector<192x128xbf16>
    %c0_82 = arith.constant 0 : index
    %c0_83 = arith.constant 0 : index
    %94 = vector.load %arg10[%c0_82, %c0_83] : memref<192x192xbf16, #tpu.memory_space<vmem>>, vector<192x192xbf16>
    %cst_84 = arith.constant dense<0.000000e+00> : vector<192x128xf32>
    %95 = tpu.matmul %94, %93, %cst_84 {dimension_numbers = #tpu.dot_dimension_numbers<[1], [0], [0], [1], [0, 0, 1, 1], [], []>} : vector<192x192xbf16>, vector<192x128xbf16>, vector<192x128xf32> -> vector<192x128xf32>
    %c0_85 = arith.constant 0 : index
    %c0_86 = arith.constant 0 : index
    %96 = vector.load %arg15[%c0_85, %c0_86] : memref<192x128xf32, #tpu.memory_space<vmem>>, vector<192x128xf32>
    %97 = arith.addf %95, %96 : vector<192x128xf32>
    %c0_87 = arith.constant 0 : index
    %c0_88 = arith.constant 0 : index
    %98 = vector.load %arg16[%c0_87, %c0_88] : memref<192x128xf32, #tpu.memory_space<vmem>>, vector<192x128xf32>
    tpu.vector_store %arg16[%c0_87, %c0_88], %97 {strides = array<i32>} : memref<192x128xf32, #tpu.memory_space<vmem>>, vector<192x128xf32>,
    return
  }
}

</mosaic_0001>

<llo_original>
// kernel: decoder_forward.1
$region0: #{decoder_forward.1}
  #allocation0 [shape = 'u32[]', space=smem, size = 0x4, offset = 0x4, fixed_abs, tag = 'smem constant byte address 0x4 - core index']
  #allocation1 [shape = 'u32[144,128]{1,0:T(1,128)}', space=vmem, size = 0x12000, scoped, tag = 'internal scratch']
  %s0 = inlined_call_operand.vmem [shape: bf16[64,4], index: 0, kind: input, shape index: {}]
  %s1 = inlined_call_operand.hbm [shape: bf16[3,4,8], index: 1, kind: input, shape index: {}]
  %s2 = inlined_call_operand.vmem [shape: bf16[3,8,16], index: 2, kind: input, shape index: {}]
  %s3 = inlined_call_operand.hbm [shape: bf16[3,16,32], index: 3, kind: input, shape index: {}]
  %s4 = inlined_call_operand.hbm [shape: bf16[3,32,64], index: 4, kind: input, shape index: {}]
  %s5 = inlined_call_operand.hbm [shape: bf16[3,64,128], index: 5, kind: input, shape index: {}]
  %s6 = inlined_call_operand.hbm [shape: bf16[64,192], index: 6, kind: input, shape index: {}]
  %s7 = inlined_call_operand.hbm [shape: bf16[64,192], index: 7, kind: input, shape index: {}]
  %s8 = inlined_call_operand.vmem [shape: bf16[64,192], index: 8, kind: input, shape index: {}]
  %s9 = inlined_call_operand.hbm [shape: bf16[64,192], index: 9, kind: input, shape index: {}]
  %s10 = inlined_call_operand.vmem [shape: bf16[192,192], index: 10, kind: input, shape index: {}]
  %s11 = inlined_call_operand.vmem [shape: f32[64,8], index: 11, kind: input, shape index: {}]
  %s12 = inlined_call_operand.vmem [shape: f32[64,16], index: 12, kind: input, shape index: {}]
  %s13 = inlined_call_operand.vmem [shape: f32[64,32], index: 13, kind: input, shape index: {}]
  %s14 = inlined_call_operand.hbm [shape: f32[64,64], index: 14, kind: input, shape index: {}]
  %s15 = inlined_call_operand.vmem [shape: f32[192,128], index: 15, kind: input, shape index: {}]
  %s16 = inlined_call_operand.vmem [shape: f32[192,128], index: 16, kind: output, shape index: {}]
  %s17 = sld [smem:[#allocation0]]
  $region106: #{decoder_forward.1} parent=0
    _
  %s19 = ssub.s32 1, %s17
  %s20 = scalar_select 0, %s19, %s17
  $region1: #{decoder_forward.1} parent=0
    #allocation2 [shape = 'u8[3072]{0}', space=vmem, size = 0xc00, scoped, tag = 'input window, operand 1, single buffered']
    #allocation3 [shape = 's32[1]{0}', space=sflag, size = 0x4, scoped, tag = 'scoped memory for decoder_forward.1']
    #allocation4 [shape = 'u8[12288]{0}', space=vmem, size = 0x3000, scoped, tag = 'input window, operand 3, single buffered']
    #allocation5 [shape = 's32[1]{0}', space=sflag, size = 0x4, scoped, tag = 'scoped memory for decoder_forward.1']
    #allocation6 [shape = 'u8[24576]{0}', space=vmem, size = 0x6000, scoped, tag = 'input window, operand 4, single buffered']
    #allocation7 [shape = 'u8[49152]{0}', space=vmem, size = 0xc000, scoped, tag = 'input window, operand 5, single buffered']
    #allocation8 [shape = 's32[1]{0}', space=sflag, size = 0x4, scoped, tag = 'scoped memory for decoder_forward.1']
    #allocation9 [shape = 'u8[32768]{0}', space=vmem, size = 0x8000, scoped, tag = 'input window, operand 6, single buffered']
    #allocation10 [shape = 'u8[32768]{0}', space=vmem, size = 0x8000, scoped, tag = 'input window, operand 7, single buffered']
    #allocation11 [shape = 's32[1]{0}', space=sflag, size = 0x4, scoped, tag = 'scoped memory for decoder_forward.1']
    #allocation12 [shape = 'u8[32768]{0}', space=vmem, size = 0x8000, scoped, tag = 'input window, operand 9, single buffered']
    #allocation13 [shape = 'u8[32768]{0}', space=vmem, size = 0x8000, scoped, tag = 'input window, operand 14, single buffered']
    #allocation14 [shape = 's32[1]{0}', space=sflag, size = 0x4, scoped, tag = 'scoped memory for decoder_forward.1']
    %21 = vsyncpa [#allocation3], 0
    %22 = vsyncpa [#allocation5], 0
    %23 = vsyncpa [#allocation8], 0
    %24 = vsyncpa [#allocation11], 0
    %25 = vsyncpa [#allocation14], 0
    // Predicated region
    $region2: #{decoder_forward.1} parent=1 // pred_check
      _
    $region3: #{decoder_forward.1} parent=1 // pred_check_branch
      %27 = sbr.rel (0) target = $region5
    $region4: #{decoder_forward.1} parent=1 // pred_region
      _
    $region5: #{decoder_forward.1} parent=1 // pred_fallthru
      _
    // Predicated region
    $region6: #{decoder_forward.1} parent=1 // pred_check
      _
    $region7: #{decoder_forward.1} parent=1 // pred_check_branch
      %29 = sbr.rel (0) target = $region9
    $region8: #{decoder_forward.1} parent=1 // pred_region
      %s31 = ssub.s32 96, 96
      %32 = vsyncadd [#allocation3], %s31
      %s33 = sshll.u32 [#allocation2], 4
      %s34 = int_to_ptr.vmem [resolvable:$true] %s33
      %39 = dma.hbm_to_vmem [thread:$0]  %s1, 96, %s34, [#allocation3], 32, 32, 2
    $region9: #{decoder_forward.1} parent=1 // pred_fallthru
      _
    // Predicated region
    $region10: #{decoder_forward.1} parent=1 // pred_check
      _
    $region11: #{decoder_forward.1} parent=1 // pred_check_branch
      %41 = sbr.rel (0) target = $region13
    $region12: #{decoder_forward.1} parent=1 // pred_region
      _
    $region13: #{decoder_forward.1} parent=1 // pred_fallthru
      _
    // Predicated region
    $region14: #{decoder_forward.1} parent=1 // pred_check
      _
    $region15: #{decoder_forward.1} parent=1 // pred_check_branch
      %43 = sbr.rel (0) target = $region17
    $region16: #{decoder_forward.1} parent=1 // pred_region
      %s45 = ssub.s32 384, 384
      %46 = vsyncadd [#allocation5], %s45
      %s47 = sshll.u32 [#allocation4], 4
      %s48 = int_to_ptr.vmem [resolvable:$true] %s47
      %53 = dma.hbm_to_vmem [thread:$0]  %s3, 384, %s48, [#allocation5], 64, 64, 4
    $region17: #{decoder_forward.1} parent=1 // pred_fallthru
      _
    // Predicated region
    $region18: #{decoder_forward.1} parent=1 // pred_check
      _
    $region19: #{decoder_forward.1} parent=1 // pred_check_branch
      %55 = sbr.rel (0) target = $region21
    $region20: #{decoder_forward.1} parent=1 // pred_region
      %s57 = ssub.s32 768, 768
      %58 = vsyncadd [#allocation5], %s57
      %s59 = sshll.u32 [#allocation6], 4
      %s60 = int_to_ptr.vmem [resolvable:$true] %s59
      %65 = dma.hbm_to_vmem [thread:$0]  %s4, 768, %s60, [#allocation5], 64, 64, 4
    $region21: #{decoder_forward.1} parent=1 // pred_fallthru
      _
    // Predicated region
    $region22: #{decoder_forward.1} parent=1 // pred_check
      _
    $region23: #{decoder_forward.1} parent=1 // pred_check_branch
      %67 = sbr.rel (0) target = $region25
    $region24: #{decoder_forward.1} parent=1 // pred_region
      %s69 = ssub.s32 1536, 1536
      %70 = vsyncadd [#allocation8], %s69
      %s71 = sshll.u32 [#allocation7], 4
      %s72 = int_to_ptr.vmem [resolvable:$true] %s71
      %77 = dma.hbm_to_vmem [thread:$0]  %s5, 1536, %s72, [#allocation8], 64, 64, 4
    $region25: #{decoder_forward.1} parent=1 // pred_fallthru
      _
    // Predicated region
    $region26: #{decoder_forward.1} parent=1 // pred_check
      _
    $region27: #{decoder_forward.1} parent=1 // pred_check_branch
      %79 = sbr.rel (0) target = $region29
    $region28: #{decoder_forward.1} parent=1 // pred_region
      %s81 = ssub.s32 1024, 1024
      %82 = vsyncadd [#allocation8], %s81
      %s83 = sshll.u32 [#allocation9], 4
      %s84 = int_to_ptr.vmem [resolvable:$true] %s83
      %89 = dma.hbm_to_vmem [thread:$0]  %s6, 1024, %s84, [#allocation8], 128, 128, 8
    $region29: #{decoder_forward.1} parent=1 // pred_fallthru
      _
    // Predicated region
    $region30: #{decoder_forward.1} parent=1 // pred_check
      _
    $region31: #{decoder_forward.1} parent=1 // pred_check_branch
      %91 = sbr.rel (0) target = $region33
    $region32: #{decoder_forward.1} parent=1 // pred_region
      %s93 = ssub.s32 1024, 1024
      %94 = vsyncadd [#allocation11], %s93
      %s95 = sshll.u32 [#allocation10], 4
      %s96 = int_to_ptr.vmem [resolvable:$true] %s95
      %101 = dma.hbm_to_vmem [thread:$0]  %s7, 1024, %s96, [#allocation11], 128, 128, 8
    $region33: #{decoder_forward.1} parent=1 // pred_fallthru
      _
    // Predicated region
    $region34: #{decoder_forward.1} parent=1 // pred_check
      _
    $region35: #{decoder_forward.1} parent=1 // pred_check_branch
      %103 = sbr.rel (0) target = $region37
    $region36: #{decoder_forward.1} parent=1 // pred_region
      _
    $region37: #{decoder_forward.1} parent=1 // pred_fallthru
      _
    // Predicated region
    $region38: #{decoder_forward.1} parent=1 // pred_check
      _
    $region39: #{decoder_forward.1} parent=1 // pred_check_branch
      %105 = sbr.rel (0) target = $region41
    $region40: #{decoder_forward.1} parent=1 // pred_region
      %s107 = ssub.s32 1024, 1024
      %108 = vsyncadd [#allocation11], %s107
      %s109 = sshll.u32 [#allocation12], 4
      %s110 = int_to_ptr.vmem [resolvable:$true] %s109
      %115 = dma.hbm_to_vmem [thread:$0]  %s9, 1024, %s110, [#allocation11], 128, 128, 8
    $region41: #{decoder_forward.1} parent=1 // pred_fallthru
      _
    // Predicated region
    $region42: #{decoder_forward.1} parent=1 // pred_check
      _
    $region43: #{decoder_forward.1} parent=1 // pred_check_branch
      %117 = sbr.rel (0) target = $region45
    $region44: #{decoder_forward.1} parent=1 // pred_region
      _
    $region45: #{decoder_forward.1} parent=1 // pred_fallthru
      _
    // Predicated region
    $region46: #{decoder_forward.1} parent=1 // pred_check
      _
    $region47: #{decoder_forward.1} parent=1 // pred_check_branch
      %119 = sbr.rel (0) target = $region49
    $region48: #{decoder_forward.1} parent=1 // pred_region
      _
    $region49: #{decoder_forward.1} parent=1 // pred_fallthru
      _
    // Predicated region
    $region50: #{decoder_forward.1} parent=1 // pred_check
      _
    $region51: #{decoder_forward.1} parent=1 // pred_check_branch
      %121 = sbr.rel (0) target = $region53
    $region52: #{decoder_forward.1} parent=1 // pred_region
      _
    $region53: #{decoder_forward.1} parent=1 // pred_fallthru
      _
    // Predicated region
    $region54: #{decoder_forward.1} parent=1 // pred_check
      _
    $region55: #{decoder_forward.1} parent=1 // pred_check_branch
      %123 = sbr.rel (0) target = $region57
    $region56: #{decoder_forward.1} parent=1 // pred_region
      _
    $region57: #{decoder_forward.1} parent=1 // pred_fallthru
      _
    // Predicated region
    $region58: #{decoder_forward.1} parent=1 // pred_check
      _
    $region59: #{decoder_forward.1} parent=1 // pred_check_branch
      %125 = sbr.rel (0) target = $region61
    $region60: #{decoder_forward.1} parent=1 // pred_region
      %s127 = ssub.s32 1024, 1024
      %128 = vsyncadd [#allocation14], %s127
      %s129 = sshll.u32 [#allocation13], 4
      %s130 = int_to_ptr.vmem [resolvable:$true] %s129
      %135 = dma.hbm_to_vmem [thread:$0]  %s14, 1024, %s130, [#allocation14], 128, 128, 8
    $region61: #{decoder_forward.1} parent=1 // pred_fallthru
      _
    // Predicated region
    $region62: #{decoder_forward.1} parent=1 // pred_check
      _
    $region63: #{decoder_forward.1} parent=1 // pred_check_branch
      %137 = sbr.rel (0) target = $region65
    $region64: #{decoder_forward.1} parent=1 // pred_region
      _
    $region65: #{decoder_forward.1} parent=1 // pred_fallthru
      _
    // Predicated region
    $region66: #{decoder_forward.1} parent=1 // pred_check
      _
    $region67: #{decoder_forward.1} parent=1 // pred_check_branch
      %139 = sbr.rel (0) target = $region69
    $region68: #{decoder_forward.1} parent=1 // pred_region
      %140 = dma.done [#allocation3], 96
    $region69: #{decoder_forward.1} parent=1 // pred_fallthru
      _
    // Predicated region
    $region70: #{decoder_forward.1} parent=1 // pred_check
      _
    $region71: #{decoder_forward.1} parent=1 // pred_check_branch
      %142 = sbr.rel (0) target = $region73
    $region72: #{decoder_forward.1} parent=1 // pred_region
      %143 = dma.done [#allocation5], 384
    $region73: #{decoder_forward.1} parent=1 // pred_fallthru
      _
    // Predicated region
    $region74: #{decoder_forward.1} parent=1 // pred_check
      _
    $region75: #{decoder_forward.1} parent=1 // pred_check_branch
      %145 = sbr.rel (0) target = $region77
    $region76: #{decoder_forward.1} parent=1 // pred_region
      %146 = dma.done [#allocation5], 768
    $region77: #{decoder_forward.1} parent=1 // pred_fallthru
      _
    // Predicated region
    $region78: #{decoder_forward.1} parent=1 // pred_check
      _
    $region79: #{decoder_forward.1} parent=1 // pred_check_branch
      %148 = sbr.rel (0) target = $region81
    $region80: #{decoder_forward.1} parent=1 // pred_region
      %149 = dma.done [#allocation8], 1536
    $region81: #{decoder_forward.1} parent=1 // pred_fallthru
      _
    // Predicated region
    $region82: #{decoder_forward.1} parent=1 // pred_check
      _
    $region83: #{decoder_forward.1} parent=1 // pred_check_branch
      %151 = sbr.rel (0) target = $region85
    $region84: #{decoder_forward.1} parent=1 // pred_region
      %152 = dma.done [#allocation8], 1024
    $region85: #{decoder_forward.1} parent=1 // pred_fallthru
      _
    // Predicated region
    $region86: #{decoder_forward.1} parent=1 // pred_check
      _
    $region87: #{decoder_forward.1} parent=1 // pred_check_branch
      %154 = sbr.rel (0) target = $region89
    $region88: #{decoder_forward.1} parent=1 // pred_region
      %155 = dma.done [#allocation11], 1024
    $region89: #{decoder_forward.1} parent=1 // pred_fallthru
      _
    // Predicated region
    $region90: #{decoder_forward.1} parent=1 // pred_check
      _
    $region91: #{decoder_forward.1} parent=1 // pred_check_branch
      %157 = sbr.rel (0) target = $region93
    $region92: #{decoder_forward.1} parent=1 // pred_region
      %158 = dma.done [#allocation11], 1024
    $region93: #{decoder_forward.1} parent=1 // pred_fallthru
      _
    // Predicated region
    $region94: #{decoder_forward.1} parent=1 // pred_check
      _
    $region95: #{decoder_forward.1} parent=1 // pred_check_branch
      %160 = sbr.rel (0) target = $region97
    $region96: #{decoder_forward.1} parent=1 // pred_region
      %161 = dma.done [#allocation14], 1024
    $region97: #{decoder_forward.1} parent=1 // pred_fallthru
      _
    %v163 = vld [vmem:[%s0] sm:$0xf]
    %v164 = vld [vmem:[%s0 + $0x4] sm:$0xf]
    %v165 = vld [vmem:[%s0 + $0x8] sm:$0xf]
    %v166 = vld [vmem:[%s0 + $0xc] sm:$0xf]
    %v167 = vld [vmem:[%s0 + $0x10] sm:$0xf]
    %v168 = vld [vmem:[%s0 + $0x14] sm:$0xf]
    %v169 = vld [vmem:[%s0 + $0x18] sm:$0xf]
    %v170 = vld [vmem:[%s0 + $0x1c] sm:$0xf]
    %v171 = vld [vmem:[#allocation2] sm:$0x3]
    %v180 = vunpack.c.l.b16 %v163
    %v181 = vunpack.c.l.b16 %v164
    %v182 = vunpack.c.l.b16 %v165
    %v183 = vunpack.c.l.b16 %v166
    %v184 = vunpack.c.l.b16 %v167
    %v185 = vunpack.c.l.b16 %v168
    %v186 = vunpack.c.l.b16 %v169
    %v187 = vunpack.c.l.b16 %v170
    %v188 = vpack.c.b16 %v181, %v180
    %v189 = vpack.c.b16 %v183, %v182
    %v190 = vpack.c.b16 %v185, %v184
    %v191 = vpack.c.b16 %v187, %v186
    %vm192 = vcmask 31744
    %v194 = vsel %vm192, %v188, 0
    %v197 = vsel %vm192, %v189, 0
    %v200 = vsel %vm192, %v190, 0
    %v203 = vsel %vm192, %v191, 0
    %vm205 = vcmask 1041408
    %v207 = vsel %vm205, %v171, 0
    %209 = vmatprep.subr.bf16.mxu0 0
    %210 = vmatpush1.bf16.msra.mxu0 %v207
    %211 = vmatprep.subr.bf16.mxu0 0
    %212 = vmatpush1.bf16.msra.mxu0 0
    %213 = vmatprep.subr.bf16.mxu0 0
    %214 = vmatpush1.bf16.msra.mxu0 0
    %215 = vmatprep.subr.bf16.mxu0 0
    %216 = vmatpush1.bf16.msra.mxu0 0
    %217 = vmatprep.subr.bf16.mxu0 0
    %218 = vmatpush1.bf16.msra.mxu0 0
    %219 = vmatprep.subr.bf16.mxu0 0
    %220 = vmatpush1.bf16.msra.mxu0 0
    %221 = vmatprep.subr.bf16.mxu0 0
    %222 = vmatpush1.bf16.msra.mxu0 0
    %223 = vmatprep.subr.bf16.mxu0 0
    %224 = vmatpush1.bf16.msra.mxu0 0
    %225 = vmatprep.subr.bf16.mxu0 0
    %226 = vmatpush1.bf16.msra.mxu0 0
    %227 = vmatprep.subr.bf16.mxu0 0
    %228 = vmatpush1.bf16.msra.mxu0 0
    %229 = vmatprep.subr.bf16.mxu0 0
    %230 = vmatpush1.bf16.msra.mxu0 0
    %231 = vmatprep.subr.bf16.mxu0 0
    %232 = vmatpush1.bf16.msra.mxu0 0
    %233 = vmatprep.subr.bf16.mxu0 0
    %234 = vmatpush1.bf16.msra.mxu0 0
    %235 = vmatprep.subr.bf16.mxu0 0
    %236 = vmatpush1.bf16.msra.mxu0 0
    %237 = vmatprep.subr.bf16.mxu0 0
    %238 = vmatpush1.bf16.msra.mxu0 0
    %239 = vmatprep.subr.bf16.mxu0 0
    %240 = vmatpush1.bf16.msra.mxu0 0
    %241 = vmatprep.mubr.bf16.mxu0 0
    %242 = vmatmul.mubr.bf16.gmra.mrb[0].mxu0 %v194
    %v243 = vpop.f32.mrb[0].mxu0
    %v244 = vadd.f32 0.0, %v243
    %v245 = vpop.f32.mrb[0].mxu0
    %v246 = vpop.f32.mrb[0].mxu0
    %v247 = vadd.f32 0.0, %v246
    %v248 = vpop.f32.mrb[0].mxu0
    %249 = vmatprep.mubr.bf16.mxu0 0
    %250 = vmatmul.mubr.bf16.gmra.mrb[0].mxu0 %v197
    %v251 = vpop.f32.mrb[0].mxu0
    %v252 = vadd.f32 0.0, %v251
    %v253 = vpop.f32.mrb[0].mxu0
    %v254 = vpop.f32.mrb[0].mxu0
    %v255 = vadd.f32 0.0, %v254
    %v256 = vpop.f32.mrb[0].mxu0
    %257 = vmatprep.mubr.bf16.mxu0 0
    %258 = vmatmul.mubr.bf16.gmra.mrb[0].mxu0 %v200
    %v259 = vpop.f32.mrb[0].mxu0
    %v260 = vadd.f32 0.0, %v259
    %v261 = vpop.f32.mrb[0].mxu0
    %v262 = vpop.f32.mrb[0].mxu0
    %v263 = vadd.f32 0.0, %v262
    %v264 = vpop.f32.mrb[0].mxu0
    %265 = vmatprep.mubr.bf16.mxu0 0
    %266 = vmatmul.mubr.bf16.gmra.mrb[0].mxu0 %v203
    %v267 = vpop.f32.mrb[0].mxu0
    %v268 = vadd.f32 0.0, %v267
    %v269 = vpop.f32.mrb[0].mxu0
    %v270 = vpop.f32.mrb[0].mxu0
    %v271 = vadd.f32 0.0, %v270
    %v272 = vpop.f32.mrb[0].mxu0
    %273 = vdwg.mxu0
    %v274 = vpack.c.bf16 %v247, %v244
    %v275 = vpack.c.bf16 %v255, %v252
    %v276 = vpack.c.bf16 %v263, %v260
    %v277 = vpack.c.bf16 %v271, %v268
    %s278 = scalar_lea.vmem [#allocation2], 2
    %v279 = vld [vmem:[%s278] sm:$0x3]
    %v281 = vsel %vm205, %v279, 0
    %283 = vmatprep.subr.bf16.mxu0 0
    %284 = vmatpush1.bf16.msra.mxu0 %v281
    %285 = vmatprep.subr.bf16.mxu0 0
    %286 = vmatpush1.bf16.msra.mxu0 0
    %287 = vmatprep.subr.bf16.mxu0 0
    %288 = vmatpush1.bf16.msra.mxu0 0
    %289 = vmatprep.subr.bf16.mxu0 0
    %290 = vmatpush1.bf16.msra.mxu0 0
    %291 = vmatprep.subr.bf16.mxu0 0
    %292 = vmatpush1.bf16.msra.mxu0 0
    %293 = vmatprep.subr.bf16.mxu0 0
    %294 = vmatpush1.bf16.msra.mxu0 0
    %295 = vmatprep.subr.bf16.mxu0 0
    %296 = vmatpush1.bf16.msra.mxu0 0
    %297 = vmatprep.subr.bf16.mxu0 0
    %298 = vmatpush1.bf16.msra.mxu0 0
    %299 = vmatprep.subr.bf16.mxu0 0
    %300 = vmatpush1.bf16.msra.mxu0 0
    %301 = vmatprep.subr.bf16.mxu0 0
    %302 = vmatpush1.bf16.msra.mxu0 0
    %303 = vmatprep.subr.bf16.mxu0 0
    %304 = vmatpush1.bf16.msra.mxu0 0
    %305 = vmatprep.subr.bf16.mxu0 0
    %306 = vmatpush1.bf16.msra.mxu0 0
    %307 = vmatprep.subr.bf16.mxu0 0
    %308 = vmatpush1.bf16.msra.mxu0 0
    %309 = vmatprep.subr.bf16.mxu0 0
    %310 = vmatpush1.bf16.msra.mxu0 0
    %311 = vmatprep.subr.bf16.mxu0 0
    %312 = vmatpush1.bf16.msra.mxu0 0
    %313 = vmatprep.subr.bf16.mxu0 0
    %314 = vmatpush1.bf16.msra.mxu0 0
    %315 = vmatprep.mubr.bf16.mxu0 0
    %316 = vmatmul.mubr.bf16.gmra.mrb[0].mxu0 %v194
    %v317 = vpop.f32.mrb[0].mxu0
    %v318 = vadd.f32 0.0, %v317
    %v319 = vpop.f32.mrb[0].mxu0
    %v320 = vpop.f32.mrb[0].mxu0
    %v321 = vadd.f32 0.0, %v320
    %v322 = vpop.f32.mrb[0].mxu0
    %323 = vmatprep.mubr.bf16.mxu0 0
    %324 = vmatmul.mubr.bf16.gmra.mrb[0].mxu0 %v197
    %v325 = vpop.f32.mrb[0].mxu0
    %v326 = vadd.f32 0.0, %v325
    %v327 = vpop.f32.mrb[0].mxu0
    %v328 = vpop.f32.mrb[0].mxu0
    %v329 = vadd.f32 0.0, %v328
    %v330 = vpop.f32.mrb[0].mxu0
    %331 = vmatprep.mubr.bf16.mxu0 0
    %332 = vmatmul.mubr.bf16.gmra.mrb[0].mxu0 %v200
    %v333 = vpop.f32.mrb[0].mxu0
    %v334 = vadd.f32 0.0, %v333
    %v335 = vpop.f32.mrb[0].mxu0
    %v336 = vpop.f32.mrb[0].mxu0
    %v337 = vadd.f32 0.0, %v336
    %v338 = vpop.f32.mrb[0].mxu0
    %339 = vmatprep.mubr.bf16.mxu0 0
    %340 = vmatmul.mubr.bf16.gmra.mrb[0].mxu0 %v203
    %v341 = vpop.f32.mrb[0].mxu0
    %v342 = vadd.f32 0.0, %v341
    %v343 = vpop.f32.mrb[0].mxu0
    %v344 = vpop.f32.mrb[0].mxu0
    %v345 = vadd.f32 0.0, %v344
    %v346 = vpop.f32.mrb[0].mxu0
    %347 = vdwg.mxu0
    %v348 = vpack.c.bf16 %v321, %v318
    %v349 = vpack.c.bf16 %v329, %v326
    %v350 = vpack.c.bf16 %v337, %v334
    %v351 = vpack.c.bf16 %v345, %v342
    %s352 = scalar_lea.vmem [#allocation2], 4
    %v353 = vld [vmem:[%s352] sm:$0x3]
    %v355 = vsel %vm205, %v353, 0
    %357 = vmatprep.subr.bf16.mxu0 0
    %358 = vmatpush1.bf16.msra.mxu0 %v355
    %359 = vmatprep.subr.bf16.mxu0 0
    %360 = vmatpush1.bf16.msra.mxu0 0
    %361 = vmatprep.subr.bf16.mxu0 0
    %362 = vmatpush1.bf16.msra.mxu0 0
    %363 = vmatprep.subr.bf16.mxu0 0
    %364 = vmatpush1.bf16.msra.mxu0 0
    %365 = vmatprep.subr.bf16.mxu0 0
    %366 = vmatpush1.bf16.msra.mxu0 0
    %367 = vmatprep.subr.bf16.mxu0 0
    %368 = vmatpush1.bf16.msra.mxu0 0
    %369 = vmatprep.subr.bf16.mxu0 0
    %370 = vmatpush1.bf16.msra.mxu0 0
    %371 = vmatprep.subr.bf16.mxu0 0
    %372 = vmatpush1.bf16.msra.mxu0 0
    %373 = vmatprep.subr.bf16.mxu0 0
    %374 = vmatpush1.bf16.msra.mxu0 0
    %375 = vmatprep.subr.bf16.mxu0 0
    %376 = vmatpush1.bf16.msra.mxu0 0
    %377 = vmatprep.subr.bf16.mxu0 0
    %378 = vmatpush1.bf16.msra.mxu0 0
    %379 = vmatprep.subr.bf16.mxu0 0
    %380 = vmatpush1.bf16.msra.mxu0 0
    %381 = vmatprep.subr.bf16.mxu0 0
    %382 = vmatpush1.bf16.msra.mxu0 0
    %383 = vmatprep.subr.bf16.mxu0 0
    %384 = vmatpush1.bf16.msra.mxu0 0
    %385 = vmatprep.subr.bf16.mxu0 0
    %386 = vmatpush1.bf16.msra.mxu0 0
    %387 = vmatprep.subr.bf16.mxu0 0
    %388 = vmatpush1.bf16.msra.mxu0 0
    %389 = vmatprep.mubr.bf16.mxu0 0
    %390 = vmatmul.mubr.bf16.gmra.mrb[0].mxu0 %v194
    %v391 = vpop.f32.mrb[0].mxu0
    %v392 = vadd.f32 0.0, %v391
    %v393 = vpop.f32.mrb[0].mxu0
    %v394 = vpop.f32.mrb[0].mxu0
    %v395 = vadd.f32 0.0, %v394
    %v396 = vpop.f32.mrb[0].mxu0
    %397 = vmatprep.mubr.bf16.mxu0 0
    %398 = vmatmul.mubr.bf16.gmra.mrb[0].mxu0 %v197
    %v399 = vpop.f32.mrb[0].mxu0
    %v400 = vadd.f32 0.0, %v399
    %v401 = vpop.f32.mrb[0].mxu0
    %v402 = vpop.f32.mrb[0].mxu0
    %v403 = vadd.f32 0.0, %v402
    %v404 = vpop.f32.mrb[0].mxu0
    %405 = vmatprep.mubr.bf16.mxu0 0
    %406 = vmatmul.mubr.bf16.gmra.mrb[0].mxu0 %v200
    %v407 = vpop.f32.mrb[0].mxu0
    %v408 = vadd.f32 0.0, %v407
    %v409 = vpop.f32.mrb[0].mxu0
    %v410 = vpop.f32.mrb[0].mxu0
    %v411 = vadd.f32 0.0, %v410
    %v412 = vpop.f32.mrb[0].mxu0
    %413 = vmatprep.mubr.bf16.mxu0 0
    %414 = vmatmul.mubr.bf16.gmra.mrb[0].mxu0 %v203
    %v415 = vpop.f32.mrb[0].mxu0
    %v416 = vadd.f32 0.0, %v415
    %v417 = vpop.f32.mrb[0].mxu0
    %v418 = vpop.f32.mrb[0].mxu0
    %v419 = vadd.f32 0.0, %v418
    %v420 = vpop.f32.mrb[0].mxu0
    %421 = vdwg.mxu0
    %v422 = vpack.c.bf16 %v395, %v392
    %v423 = vpack.c.bf16 %v403, %v400
    %v424 = vpack.c.bf16 %v411, %v408
    %v425 = vpack.c.bf16 %v419, %v416
    %v426 = vld [vmem:[#allocation9] sm:$0xff]
    %v427 = vld [vmem:[#allocation9 + $0x8] sm:$0xff]
    %v428 = vld [vmem:[#allocation9 + $0x10] sm:$0xff]
    %v429 = vld [vmem:[#allocation9 + $0x18] sm:$0xff]
    %v430 = vld [vmem:[#allocation9 + $0x20] sm:$0xff]
    %v431 = vld [vmem:[#allocation9 + $0x28] sm:$0xff]
    %v432 = vld [vmem:[#allocation9 + $0x30] sm:$0xff]
    %v433 = vld [vmem:[#allocation9 + $0x38] sm:$0xff]
    %v434 = vld [vmem:[%s11] sm:$0xff]
    %v435 = vld [vmem:[%s11 + $0x8] sm:$0xff]
    %v436 = vld [vmem:[%s11 + $0x10] sm:$0xff]
    %v437 = vld [vmem:[%s11 + $0x18] sm:$0xff]
    %v438 = vld [vmem:[%s11 + $0x20] sm:$0xff]
    %v439 = vld [vmem:[%s11 + $0x28] sm:$0xff]
    %v440 = vld [vmem:[%s11 + $0x30] sm:$0xff]
    %v441 = vld [vmem:[%s11 + $0x38] sm:$0xff]
    %v450 = vunpack.c.l.b16 %v426
    %v451 = vunpack.c.h.b16 %v426
    %v452 = vunpack.c.l.b16 %v427
    %v453 = vunpack.c.h.b16 %v427
    %v454 = vunpack.c.l.b16 %v428
    %v455 = vunpack.c.h.b16 %v428
    %v456 = vunpack.c.l.b16 %v429
    %v457 = vunpack.c.h.b16 %v429
    %v458 = vunpack.c.l.b16 %v430
    %v459 = vunpack.c.h.b16 %v430
    %v460 = vunpack.c.l.b16 %v431
    %v461 = vunpack.c.h.b16 %v431
    %v462 = vunpack.c.l.b16 %v432
    %v463 = vunpack.c.h.b16 %v432
    %v464 = vunpack.c.l.b16 %v433
    %v465 = vunpack.c.h.b16 %v433
    %v466 = vpack.c.b16 %v452, %v450
    %v467 = vpack.c.b16 %v453, %v451
    %v468 = vpack.c.b16 %v456, %v454
    %v469 = vpack.c.b16 %v457, %v455
    %v470 = vpack.c.b16 %v460, %v458
    %v471 = vpack.c.b16 %v461, %v459
    %v472 = vpack.c.b16 %v464, %v462
    %v473 = vpack.c.b16 %v465, %v463
    %vm478 = vcmask 523264
    %v480 = vsel %vm478, %v467, 0
    %v483 = vsel %vm478, %v469, 0
    %v486 = vsel %vm478, %v471, 0
    %v489 = vsel %vm478, %v473, 0
    %491 = vmatprep.subr.bf16.mxu0 0
    %492 = vmatpush1.bf16.msra.mxu0 %v274
    %493 = vmatprep.subr.bf16.mxu0 0
    %494 = vmatpush1.bf16.msra.mxu0 %v275
    %495 = vmatprep.subr.bf16.mxu0 0
    %496 = vmatpush1.bf16.msra.mxu0 %v276
    %497 = vmatprep.subr.bf16.mxu0 0
    %498 = vmatpush1.bf16.msra.mxu0 %v277
    %499 = vmatprep.subr.bf16.mxu0 0
    %500 = vmatpush1.bf16.msra.mxu0 %v348
    %501 = vmatprep.subr.bf16.mxu0 0
    %502 = vmatpush1.bf16.msra.mxu0 %v349
    %503 = vmatprep.subr.bf16.mxu0 0
    %504 = vmatpush1.bf16.msra.mxu0 %v350
    %505 = vmatprep.subr.bf16.mxu0 0
    %506 = vmatpush1.bf16.msra.mxu0 %v351
    %507 = vmatprep.subr.bf16.mxu0 0
    %508 = vmatpush1.bf16.msra.mxu0 %v422
    %509 = vmatprep.subr.bf16.mxu0 0
    %510 = vmatpush1.bf16.msra.mxu0 %v423
    %511 = vmatprep.subr.bf16.mxu0 0
    %512 = vmatpush1.bf16.msra.mxu0 %v424
    %513 = vmatprep.subr.bf16.mxu0 0
    %514 = vmatpush1.bf16.msra.mxu0 %v425
    %515 = vmatprep.subr.bf16.mxu0 0
    %516 = vmatpush1.bf16.msra.mxu0 0
    %517 = vmatprep.subr.bf16.mxu0 0
    %518 = vmatpush1.bf16.msra.mxu0 0
    %519 = vmatprep.subr.bf16.mxu0 0
    %520 = vmatpush1.bf16.msra.mxu0 0
    %521 = vmatprep.subr.bf16.mxu0 0
    %522 = vmatpush1.bf16.msra.mxu0 0
    %523 = vmatprep.mubr.bf16.mxu0 %v480
    %524 = vmatmul.mubr.bf16.gmra.mrb[0].mxu0 %v466
    %v525 = vpop.f32.mrb[0].mxu0
    %v526 = vadd.f32 %v434, %v525
    %v527 = vpop.f32.mrb[0].mxu0
    %v528 = vpop.f32.mrb[0].mxu0
    %v529 = vadd.f32 %v435, %v528
    %v530 = vpop.f32.mrb[0].mxu0
    %531 = vmatprep.mubr.bf16.mxu0 %v483
    %532 = vmatmul.mubr.bf16.gmra.mrb[0].mxu0 %v468
    %v533 = vpop.f32.mrb[0].mxu0
    %v534 = vadd.f32 %v436, %v533
    %v535 = vpop.f32.mrb[0].mxu0
    %v536 = vpop.f32.mrb[0].mxu0
    %v537 = vadd.f32 %v437, %v536
    %v538 = vpop.f32.mrb[0].mxu0
    %539 = vmatprep.mubr.bf16.mxu0 %v486
    %540 = vmatmul.mubr.bf16.gmra.mrb[0].mxu0 %v470
    %v541 = vpop.f32.mrb[0].mxu0
    %v542 = vadd.f32 %v438, %v541
    %v543 = vpop.f32.mrb[0].mxu0
    %v544 = vpop.f32.mrb[0].mxu0
    %v545 = vadd.f32 %v439, %v544
    %v546 = vpop.f32.mrb[0].mxu0
    %547 = vmatprep.mubr.bf16.mxu0 %v489
    %548 = vmatmul.mubr.bf16.gmra.mrb[0].mxu0 %v472
    %v549 = vpop.f32.mrb[0].mxu0
    %v550 = vadd.f32 %v440, %v549
    %v551 = vpop.f32.mrb[0].mxu0
    %v552 = vpop.f32.mrb[0].mxu0
    %v553 = vadd.f32 %v441, %v552
    %v554 = vpop.f32.mrb[0].mxu0
    %555 = vdwg.mxu0
    %v556 = vmax.f32 %v526, 0.0
    %v557 = vmax.f32 %v529, 0.0
    %v558 = vmax.f32 %v534, 0.0
    %v559 = vmax.f32 %v537, 0.0
    %v560 = vmax.f32 %v542, 0.0
    %v561 = vmax.f32 %v545, 0.0
    %v562 = vmax.f32 %v550, 0.0
    %v563 = vmax.f32 %v553, 0.0
    %v564 = vpack.c.bf16 %v557, %v556
    %v565 = vpack.c.bf16 %v559, %v558
    %v566 = vpack.c.bf16 %v561, %v560
    %v567 = vpack.c.bf16 %v563, %v562
    %v568 = vld [vmem:[%s2] sm:$0xf]
    %vm569 = vcmask 64512
    %v571 = vsel %vm569, %v564, 0
    %v574 = vsel %vm569, %v565, 0
    %v577 = vsel %vm569, %v566, 0
    %v580 = vsel %vm569, %v567, 0
    %vm582 = vcmask 1043456
    %v584 = vsel %vm582, %v568, 0
    %586 = vmatprep.subr.bf16.mxu0 0
    %587 = vmatpush1.bf16.msra.mxu0 %v584
    %588 = vmatprep.subr.bf16.mxu0 0
    %589 = vmatpush1.bf16.msra.mxu0 0
    %590 = vmatprep.subr.bf16.mxu0 0
    %591 = vmatpush1.bf16.msra.mxu0 0
    %592 = vmatprep.subr.bf16.mxu0 0
    %593 = vmatpush1.bf16.msra.mxu0 0
    %594 = vmatprep.subr.bf16.mxu0 0
    %595 = vmatpush1.bf16.msra.mxu0 0
    %596 = vmatprep.subr.bf16.mxu0 0
    %597 = vmatpush1.bf16.msra.mxu0 0
    %598 = vmatprep.subr.bf16.mxu0 0
    %599 = vmatpush1.bf16.msra.mxu0 0
    %600 = vmatprep.subr.bf16.mxu0 0
    %601 = vmatpush1.bf16.msra.mxu0 0
    %602 = vmatprep.subr.bf16.mxu0 0
    %603 = vmatpush1.bf16.msra.mxu0 0
    %604 = vmatprep.subr.bf16.mxu0 0
    %605 = vmatpush1.bf16.msra.mxu0 0
    %606 = vmatprep.subr.bf16.mxu0 0
    %607 = vmatpush1.bf16.msra.mxu0 0
    %608 = vmatprep.subr.bf16.mxu0 0
    %609 = vmatpush1.bf16.msra.mxu0 0
    %610 = vmatprep.subr.bf16.mxu0 0
    %611 = vmatpush1.bf16.msra.mxu0 0
    %612 = vmatprep.subr.bf16.mxu0 0
    %613 = vmatpush1.bf16.msra.mxu0 0
    %614 = vmatprep.subr.bf16.mxu0 0
    %615 = vmatpush1.bf16.msra.mxu0 0
    %616 = vmatprep.subr.bf16.mxu0 0
    %617 = vmatpush1.bf16.msra.mxu0 0
    %618 = vmatprep.mubr.bf16.mxu0 0
    %619 = vmatmul.mubr.bf16.gmra.mrb[0].mxu0 %v571
    %v620 = vpop.f32.mrb[0].mxu0
    %v621 = vadd.f32 0.0, %v620
    %v622 = vpop.f32.mrb[0].mxu0
    %v623 = vpop.f32.mrb[0].mxu0
    %v624 = vadd.f32 0.0, %v623
    %v625 = vpop.f32.mrb[0].mxu0
    %626 = vmatprep.mubr.bf16.mxu0 0
    %627 = vmatmul.mubr.bf16.gmra.mrb[0].mxu0 %v574
    %v628 = vpop.f32.mrb[0].mxu0
    %v629 = vadd.f32 0.0, %v628
    %v630 = vpop.f32.mrb[0].mxu0
    %v631 = vpop.f32.mrb[0].mxu0
    %v632 = vadd.f32 0.0, %v631
    %v633 = vpop.f32.mrb[0].mxu0
    %634 = vmatprep.mubr.bf16.mxu0 0
    %635 = vmatmul.mubr.bf16.gmra.mrb[0].mxu0 %v577
    %v636 = vpop.f32.mrb[0].mxu0
    %v637 = vadd.f32 0.0, %v636
    %v638 = vpop.f32.mrb[0].mxu0
    %v639 = vpop.f32.mrb[0].mxu0
    %v640 = vadd.f32 0.0, %v639
    %v641 = vpop.f32.mrb[0].mxu0
    %642 = vmatprep.mubr.bf16.mxu0 0
    %643 = vmatmul.mubr.bf16.gmra.mrb[0].mxu0 %v580
    %v644 = vpop.f32.mrb[0].mxu0
    %v645 = vadd.f32 0.0, %v644
    %v646 = vpop.f32.mrb[0].mxu0
    %v647 = vpop.f32.mrb[0].mxu0
    %v648 = vadd.f32 0.0, %v647
    %v649 = vpop.f32.mrb[0].mxu0
    %650 = vdwg.mxu0
    %v651 = vpack.c.bf16 %v624, %v621
    %v652 = vpack.c.bf16 %v632, %v629
    %v653 = vpack.c.bf16 %v640, %v637
    %v654 = vpack.c.bf16 %v648, %v645
    %s655 = scalar_lea.vmem %s2, 4
    %v656 = vld [vmem:[%s655] sm:$0xf]
    %v658 = vsel %vm582, %v656, 0
    %660 = vmatprep.subr.bf16.mxu0 0
    %661 = vmatpush1.bf16.msra.mxu0 %v658
    %662 = vmatprep.subr.bf16.mxu0 0
    %663 = vmatpush1.bf16.msra.mxu0 0
    %664 = vmatprep.subr.bf16.mxu0 0
    %665 = vmatpush1.bf16.msra.mxu0 0
    %666 = vmatprep.subr.bf16.mxu0 0
    %667 = vmatpush1.bf16.msra.mxu0 0
    %668 = vmatprep.subr.bf16.mxu0 0
    %669 = vmatpush1.bf16.msra.mxu0 0
    %670 = vmatprep.subr.bf16.mxu0 0
    %671 = vmatpush1.bf16.msra.mxu0 0
    %672 = vmatprep.subr.bf16.mxu0 0
    %673 = vmatpush1.bf16.msra.mxu0 0
    %674 = vmatprep.subr.bf16.mxu0 0
    %675 = vmatpush1.bf16.msra.mxu0 0
    %676 = vmatprep.subr.bf16.mxu0 0
    %677 = vmatpush1.bf16.msra.mxu0 0
    %678 = vmatprep.subr.bf16.mxu0 0
    %679 = vmatpush1.bf16.msra.mxu0 0
    %680 = vmatprep.subr.bf16.mxu0 0
    %681 = vmatpush1.bf16.msra.mxu0 0
    %682 = vmatprep.subr.bf16.mxu0 0
    %683 = vmatpush1.bf16.msra.mxu0 0
    %684 = vmatprep.subr.bf16.mxu0 0
    %685 = vmatpush1.bf16.msra.mxu0 0
    %686 = vmatprep.subr.bf16.mxu0 0
    %687 = vmatpush1.bf16.msra.mxu0 0
    %688 = vmatprep.subr.bf16.mxu0 0
    %689 = vmatpush1.bf16.msra.mxu0 0
    %690 = vmatprep.subr.bf16.mxu0 0
    %691 = vmatpush1.bf16.msra.mxu0 0
    %692 = vmatprep.mubr.bf16.mxu0 0
    %693 = vmatmul.mubr.bf16.gmra.mrb[0].mxu0 %v571
    %v694 = vpop.f32.mrb[0].mxu0
    %v695 = vadd.f32 0.0, %v694
    %v696 = vpop.f32.mrb[0].mxu0
    %v697 = vpop.f32.mrb[0].mxu0
    %v698 = vadd.f32 0.0, %v697
    %v699 = vpop.f32.mrb[0].mxu0
    %700 = vmatprep.mubr.bf16.mxu0 0
    %701 = vmatmul.mubr.bf16.gmra.mrb[0].mxu0 %v574
    %v702 = vpop.f32.mrb[0].mxu0
    %v703 = vadd.f32 0.0, %v702
    %v704 = vpop.f32.mrb[0].mxu0
    %v705 = vpop.f32.mrb[0].mxu0
    %v706 = vadd.f32 0.0, %v705
    %v707 = vpop.f32.mrb[0].mxu0
    %708 = vmatprep.mubr.bf16.mxu0 0
    %709 = vmatmul.mubr.bf16.gmra.mrb[0].mxu0 %v577
    %v710 = vpop.f32.mrb[0].mxu0
    %v711 = vadd.f32 0.0, %v710
    %v712 = vpop.f32.mrb[0].mxu0
    %v713 = vpop.f32.mrb[0].mxu0
    %v714 = vadd.f32 0.0, %v713
    %v715 = vpop.f32.mrb[0].mxu0
    %716 = vmatprep.mubr.bf16.mxu0 0
    %717 = vmatmul.mubr.bf16.gmra.mrb[0].mxu0 %v580
    %v718 = vpop.f32.mrb[0].mxu0
    %v719 = vadd.f32 0.0, %v718
    %v720 = vpop.f32.mrb[0].mxu0
    %v721 = vpop.f32.mrb[0].mxu0
    %v722 = vadd.f32 0.0, %v721
    %v723 = vpop.f32.mrb[0].mxu0
    %724 = vdwg.mxu0
    %v725 = vpack.c.bf16 %v698, %v695
    %v726 = vpack.c.bf16 %v706, %v703
    %v727 = vpack.c.bf16 %v714, %v711
    %v728 = vpack.c.bf16 %v722, %v719
    %s729 = scalar_lea.vmem %s2, 8
    %v730 = vld [vmem:[%s729] sm:$0xf]
    %v732 = vsel %vm582, %v730, 0
    %734 = vmatprep.subr.bf16.mxu0 0
    %735 = vmatpush1.bf16.msra.mxu0 %v732
    %736 = vmatprep.subr.bf16.mxu0 0
    %737 = vmatpush1.bf16.msra.mxu0 0
    %738 = vmatprep.subr.bf16.mxu0 0
    %739 = vmatpush1.bf16.msra.mxu0 0
    %740 = vmatprep.subr.bf16.mxu0 0
    %741 = vmatpush1.bf16.msra.mxu0 0
    %742 = vmatprep.subr.bf16.mxu0 0
    %743 = vmatpush1.bf16.msra.mxu0 0
    %744 = vmatprep.subr.bf16.mxu0 0
    %745 = vmatpush1.bf16.msra.mxu0 0
    %746 = vmatprep.subr.bf16.mxu0 0
    %747 = vmatpush1.bf16.msra.mxu0 0
    %748 = vmatprep.subr.bf16.mxu0 0
    %749 = vmatpush1.bf16.msra.mxu0 0
    %750 = vmatprep.subr.bf16.mxu0 0
    %751 = vmatpush1.bf16.msra.mxu0 0
    %752 = vmatprep.subr.bf16.mxu0 0
    %753 = vmatpush1.bf16.msra.mxu0 0
    %754 = vmatprep.subr.bf16.mxu0 0
    %755 = vmatpush1.bf16.msra.mxu0 0
    %756 = vmatprep.subr.bf16.mxu0 0
    %757 = vmatpush1.bf16.msra.mxu0 0
    %758 = vmatprep.subr.bf16.mxu0 0
    %759 = vmatpush1.bf16.msra.mxu0 0
    %760 = vmatprep.subr.bf16.mxu0 0
    %761 = vmatpush1.bf16.msra.mxu0 0
    %762 = vmatprep.subr.bf16.mxu0 0
    %763 = vmatpush1.bf16.msra.mxu0 0
    %764 = vmatprep.subr.bf16.mxu0 0
    %765 = vmatpush1.bf16.msra.mxu0 0
    %766 = vmatprep.mubr.bf16.mxu0 0
    %767 = vmatmul.mubr.bf16.gmra.mrb[0].mxu0 %v571
    %v768 = vpop.f32.mrb[0].mxu0
    %v769 = vadd.f32 0.0, %v768
    %v770 = vpop.f32.mrb[0].mxu0
    %v771 = vpop.f32.mrb[0].mxu0
    %v772 = vadd.f32 0.0, %v771
    %v773 = vpop.f32.mrb[0].mxu0
    %774 = vmatprep.mubr.bf16.mxu0 0
    %775 = vmatmul.mubr.bf16.gmra.mrb[0].mxu0 %v574
    %v776 = vpop.f32.mrb[0].mxu0
    %v777 = vadd.f32 0.0, %v776
    %v778 = vpop.f32.mrb[0].mxu0
    %v779 = vpop.f32.mrb[0].mxu0
    %v780 = vadd.f32 0.0, %v779
    %v781 = vpop.f32.mrb[0].mxu0
    %782 = vmatprep.mubr.bf16.mxu0 0
    %783 = vmatmul.mubr.bf16.gmra.mrb[0].mxu0 %v577
    %v784 = vpop.f32.mrb[0].mxu0
    %v785 = vadd.f32 0.0, %v784
    %v786 = vpop.f32.mrb[0].mxu0
    %v787 = vpop.f32.mrb[0].mxu0
    %v788 = vadd.f32 0.0, %v787
    %v789 = vpop.f32.mrb[0].mxu0
    %790 = vmatprep.mubr.bf16.mxu0 0
    %791 = vmatmul.mubr.bf16.gmra.mrb[0].mxu0 %v580
    %v792 = vpop.f32.mrb[0].mxu0
    %v793 = vadd.f32 0.0, %v792
    %v794 = vpop.f32.mrb[0].mxu0
    %v795 = vpop.f32.mrb[0].mxu0
    %v796 = vadd.f32 0.0, %v795
    %v797 = vpop.f32.mrb[0].mxu0
    %798 = vdwg.mxu0
    %v799 = vpack.c.bf16 %v772, %v769
    %v800 = vpack.c.bf16 %v780, %v777
    %v801 = vpack.c.bf16 %v788, %v785
    %v802 = vpack.c.bf16 %v796, %v793
    %v803 = vld [vmem:[#allocation10] sm:$0xff]
    %v804 = vld [vmem:[#allocation10 + $0x8] sm:$0xff]
    %v805 = vld [vmem:[#allocation10 + $0x10] sm:$0xff]
    %v806 = vld [vmem:[#allocation10 + $0x18] sm:$0xff]
    %v807 = vld [vmem:[#allocation10 + $0x20] sm:$0xff]
    %v808 = vld [vmem:[#allocation10 + $0x28] sm:$0xff]
    %v809 = vld [vmem:[#allocation10 + $0x30] sm:$0xff]
    %v810 = vld [vmem:[#allocation10 + $0x38] sm:$0xff]
    %v811 = vld [vmem:[%s12] sm:$0xff]
    %v812 = vld [vmem:[%s12 + $0x8] sm:$0xff]
    %v813 = vld [vmem:[%s12 + $0x10] sm:$0xff]
    %v814 = vld [vmem:[%s12 + $0x18] sm:$0xff]
    %v815 = vld [vmem:[%s12 + $0x20] sm:$0xff]
    %v816 = vld [vmem:[%s12 + $0x28] sm:$0xff]
    %v817 = vld [vmem:[%s12 + $0x30] sm:$0xff]
    %v818 = vld [vmem:[%s12 + $0x38] sm:$0xff]
    %v827 = vunpack.c.l.b16 %v803
    %v828 = vunpack.c.h.b16 %v803
    %v829 = vunpack.c.l.b16 %v804
    %v830 = vunpack.c.h.b16 %v804
    %v831 = vunpack.c.l.b16 %v805
    %v832 = vunpack.c.h.b16 %v805
    %v833 = vunpack.c.l.b16 %v806
    %v834 = vunpack.c.h.b16 %v806
    %v835 = vunpack.c.l.b16 %v807
    %v836 = vunpack.c.h.b16 %v807
    %v837 = vunpack.c.l.b16 %v808
    %v838 = vunpack.c.h.b16 %v808
    %v839 = vunpack.c.l.b16 %v809
    %v840 = vunpack.c.h.b16 %v809
    %v841 = vunpack.c.l.b16 %v810
    %v842 = vunpack.c.h.b16 %v810
    %v843 = vpack.c.b16 %v829, %v827
    %v844 = vpack.c.b16 %v830, %v828
    %v845 = vpack.c.b16 %v833, %v831
    %v846 = vpack.c.b16 %v834, %v832
    %v847 = vpack.c.b16 %v837, %v835
    %v848 = vpack.c.b16 %v838, %v836
    %v849 = vpack.c.b16 %v841, %v839
    %v850 = vpack.c.b16 %v842, %v840
    %v856 = vsel %vm478, %v844, 0
    %v859 = vsel %vm478, %v846, 0
    %v862 = vsel %vm478, %v848, 0
    %v865 = vsel %vm478, %v850, 0
    %867 = vmatprep.subr.bf16.mxu0 0
    %868 = vmatpush1.bf16.msra.mxu0 %v651
    %869 = vmatprep.subr.bf16.mxu0 0
    %870 = vmatpush1.bf16.msra.mxu0 %v652
    %871 = vmatprep.subr.bf16.mxu0 0
    %872 = vmatpush1.bf16.msra.mxu0 %v653
    %873 = vmatprep.subr.bf16.mxu0 0
    %874 = vmatpush1.bf16.msra.mxu0 %v654
    %875 = vmatprep.subr.bf16.mxu0 0
    %876 = vmatpush1.bf16.msra.mxu0 %v725
    %877 = vmatprep.subr.bf16.mxu0 0
    %878 = vmatpush1.bf16.msra.mxu0 %v726
    %879 = vmatprep.subr.bf16.mxu0 0
    %880 = vmatpush1.bf16.msra.mxu0 %v727
    %881 = vmatprep.subr.bf16.mxu0 0
    %882 = vmatpush1.bf16.msra.mxu0 %v728
    %883 = vmatprep.subr.bf16.mxu0 0
    %884 = vmatpush1.bf16.msra.mxu0 %v799
    %885 = vmatprep.subr.bf16.mxu0 0
    %886 = vmatpush1.bf16.msra.mxu0 %v800
    %887 = vmatprep.subr.bf16.mxu0 0
    %888 = vmatpush1.bf16.msra.mxu0 %v801
    %889 = vmatprep.subr.bf16.mxu0 0
    %890 = vmatpush1.bf16.msra.mxu0 %v802
    %891 = vmatprep.subr.bf16.mxu0 0
    %892 = vmatpush1.bf16.msra.mxu0 0
    %893 = vmatprep.subr.bf16.mxu0 0
    %894 = vmatpush1.bf16.msra.mxu0 0
    %895 = vmatprep.subr.bf16.mxu0 0
    %896 = vmatpush1.bf16.msra.mxu0 0
    %897 = vmatprep.subr.bf16.mxu0 0
    %898 = vmatpush1.bf16.msra.mxu0 0
    %899 = vmatprep.mubr.bf16.mxu0 %v856
    %900 = vmatmul.mubr.bf16.gmra.mrb[0].mxu0 %v843
    %v901 = vpop.f32.mrb[0].mxu0
    %v902 = vadd.f32 %v811, %v901
    %v903 = vpop.f32.mrb[0].mxu0
    %v904 = vpop.f32.mrb[0].mxu0
    %v905 = vadd.f32 %v812, %v904
    %v906 = vpop.f32.mrb[0].mxu0
    %907 = vmatprep.mubr.bf16.mxu0 %v859
    %908 = vmatmul.mubr.bf16.gmra.mrb[0].mxu0 %v845
    %v909 = vpop.f32.mrb[0].mxu0
    %v910 = vadd.f32 %v813, %v909
    %v911 = vpop.f32.mrb[0].mxu0
    %v912 = vpop.f32.mrb[0].mxu0
    %v913 = vadd.f32 %v814, %v912
    %v914 = vpop.f32.mrb[0].mxu0
    %915 = vmatprep.mubr.bf16.mxu0 %v862
    %916 = vmatmul.mubr.bf16.gmra.mrb[0].mxu0 %v847
    %v917 = vpop.f32.mrb[0].mxu0
    %v918 = vadd.f32 %v815, %v917
    %v919 = vpop.f32.mrb[0].mxu0
    %v920 = vpop.f32.mrb[0].mxu0
    %v921 = vadd.f32 %v816, %v920
    %v922 = vpop.f32.mrb[0].mxu0
    %923 = vmatprep.mubr.bf16.mxu0 %v865
    %924 = vmatmul.mubr.bf16.gmra.mrb[0].mxu0 %v849
    %v925 = vpop.f32.mrb[0].mxu0
    %v926 = vadd.f32 %v817, %v925
    %v927 = vpop.f32.mrb[0].mxu0
    %v928 = vpop.f32.mrb[0].mxu0
    %v929 = vadd.f32 %v818, %v928
    %v930 = vpop.f32.mrb[0].mxu0
    %931 = vdwg.mxu0
    %v932 = vmax.f32 %v902, 0.0
    %v933 = vmax.f32 %v905, 0.0
    %v934 = vmax.f32 %v910, 0.0
    %v935 = vmax.f32 %v913, 0.0
    %v936 = vmax.f32 %v918, 0.0
    %v937 = vmax.f32 %v921, 0.0
    %v938 = vmax.f32 %v926, 0.0
    %v939 = vmax.f32 %v929, 0.0
    %v940 = vpack.c.bf16 %v933, %v932
    %v941 = vpack.c.bf16 %v935, %v934
    %v942 = vpack.c.bf16 %v937, %v936
    %v943 = vpack.c.bf16 %v939, %v938
    %v944 = vld [vmem:[#allocation4] sm:$0xf]
    %v945 = vld [vmem:[#allocation4 + $0x4] sm:$0xf]
    %v948 = vunpack.c.l.b16 %v944
    %v949 = vunpack.c.l.b16 %v945
    %v950 = vpack.c.b16 %v949, %v948
    %vm952 = vcmask 130048
    %v954 = vsel %vm952, %v940, 0
    %v957 = vsel %vm952, %v941, 0
    %v960 = vsel %vm952, %v942, 0
    %v963 = vsel %vm952, %v943, 0
    %965 = vmatprep.subr.bf16.mxu0 0
    %966 = vmatpush1.bf16.msra.mxu0 %v950
    %967 = vmatprep.subr.bf16.mxu0 0
    %968 = vmatpush1.bf16.msra.mxu0 0
    %969 = vmatprep.subr.bf16.mxu0 0
    %970 = vmatpush1.bf16.msra.mxu0 0
    %971 = vmatprep.subr.bf16.mxu0 0
    %972 = vmatpush1.bf16.msra.mxu0 0
    %973 = vmatprep.subr.bf16.mxu0 0
    %974 = vmatpush1.bf16.msra.mxu0 0
    %975 = vmatprep.subr.bf16.mxu0 0
    %976 = vmatpush1.bf16.msra.mxu0 0
    %977 = vmatprep.subr.bf16.mxu0 0
    %978 = vmatpush1.bf16.msra.mxu0 0
    %979 = vmatprep.subr.bf16.mxu0 0
    %980 = vmatpush1.bf16.msra.mxu0 0
    %981 = vmatprep.subr.bf16.mxu0 0
    %982 = vmatpush1.bf16.msra.mxu0 0
    %983 = vmatprep.subr.bf16.mxu0 0
    %984 = vmatpush1.bf16.msra.mxu0 0
    %985 = vmatprep.subr.bf16.mxu0 0
    %986 = vmatpush1.bf16.msra.mxu0 0
    %987 = vmatprep.subr.bf16.mxu0 0
    %988 = vmatpush1.bf16.msra.mxu0 0
    %989 = vmatprep.subr.bf16.mxu0 0
    %990 = vmatpush1.bf16.msra.mxu0 0
    %991 = vmatprep.subr.bf16.mxu0 0
    %992 = vmatpush1.bf16.msra.mxu0 0
    %993 = vmatprep.subr.bf16.mxu0 0
    %994 = vmatpush1.bf16.msra.mxu0 0
    %995 = vmatprep.subr.bf16.mxu0 0
    %996 = vmatpush1.bf16.msra.mxu0 0
    %997 = vmatprep.mubr.bf16.mxu0 0
    %998 = vmatmul.mubr.bf16.gmra.mrb[0].mxu0 %v954
    %v999 = vpop.f32.mrb[0].mxu0
    %v1000 = vadd.f32 0.0, %v999
    %v1001 = vpop.f32.mrb[0].mxu0
    %v1002 = vpop.f32.mrb[0].mxu0
    %v1003 = vadd.f32 0.0, %v1002
    %v1004 = vpop.f32.mrb[0].mxu0
    %1005 = vmatprep.mubr.bf16.mxu0 0
    %1006 = vmatmul.mubr.bf16.gmra.mrb[0].mxu0 %v957
    %v1007 = vpop.f32.mrb[0].mxu0
    %v1008 = vadd.f32 0.0, %v1007
    %v1009 = vpop.f32.mrb[0].mxu0
    %v1010 = vpop.f32.mrb[0].mxu0
    %v1011 = vadd.f32 0.0, %v1010
    %v1012 = vpop.f32.mrb[0].mxu0
    %1013 = vmatprep.mubr.bf16.mxu0 0
    %1014 = vmatmul.mubr.bf16.gmra.mrb[0].mxu0 %v960
    %v1015 = vpop.f32.mrb[0].mxu0
    %v1016 = vadd.f32 0.0, %v1015
    %v1017 = vpop.f32.mrb[0].mxu0
    %v1018 = vpop.f32.mrb[0].mxu0
    %v1019 = vadd.f32 0.0, %v1018
    %v1020 = vpop.f32.mrb[0].mxu0
    %1021 = vmatprep.mubr.bf16.mxu0 0
    %1022 = vmatmul.mubr.bf16.gmra.mrb[0].mxu0 %v963
    %v1023 = vpop.f32.mrb[0].mxu0
    %v1024 = vadd.f32 0.0, %v1023
    %v1025 = vpop.f32.mrb[0].mxu0
    %v1026 = vpop.f32.mrb[0].mxu0
    %v1027 = vadd.f32 0.0, %v1026
    %v1028 = vpop.f32.mrb[0].mxu0
    %1029 = vdwg.mxu0
    %v1030 = vpack.c.bf16 %v1003, %v1000
    %v1031 = vpack.c.bf16 %v1011, %v1008
    %v1032 = vpack.c.bf16 %v1019, %v1016
    %v1033 = vpack.c.bf16 %v1027, %v1024
    %s1034 = scalar_lea.vmem [#allocation4], 8
    %v1035 = vld [vmem:[%s1034] sm:$0xf]
    %v1036 = vld [vmem:[%s1034 + $0x4] sm:$0xf]
    %v1039 = vunpack.c.l.b16 %v1035
    %v1040 = vunpack.c.l.b16 %v1036
    %v1041 = vpack.c.b16 %v1040, %v1039
    %1043 = vmatprep.subr.bf16.mxu0 0
    %1044 = vmatpush1.bf16.msra.mxu0 %v1041
    %1045 = vmatprep.subr.bf16.mxu0 0
    %1046 = vmatpush1.bf16.msra.mxu0 0
    %1047 = vmatprep.subr.bf16.mxu0 0
    %1048 = vmatpush1.bf16.msra.mxu0 0
    %1049 = vmatprep.subr.bf16.mxu0 0
    %1050 = vmatpush1.bf16.msra.mxu0 0
    %1051 = vmatprep.subr.bf16.mxu0 0
    %1052 = vmatpush1.bf16.msra.mxu0 0
    %1053 = vmatprep.subr.bf16.mxu0 0
    %1054 = vmatpush1.bf16.msra.mxu0 0
    %1055 = vmatprep.subr.bf16.mxu0 0
    %1056 = vmatpush1.bf16.msra.mxu0 0
    %1057 = vmatprep.subr.bf16.mxu0 0
    %1058 = vmatpush1.bf16.msra.mxu0 0
    %1059 = vmatprep.subr.bf16.mxu0 0
    %1060 = vmatpush1.bf16.msra.mxu0 0
    %1061 = vmatprep.subr.bf16.mxu0 0
    %1062 = vmatpush1.bf16.msra.mxu0 0
    %1063 = vmatprep.subr.bf16.mxu0 0
    %1064 = vmatpush1.bf16.msra.mxu0 0
    %1065 = vmatprep.subr.bf16.mxu0 0
    %1066 = vmatpush1.bf16.msra.mxu0 0
    %1067 = vmatprep.subr.bf16.mxu0 0
    %1068 = vmatpush1.bf16.msra.mxu0 0
    %1069 = vmatprep.subr.bf16.mxu0 0
    %1070 = vmatpush1.bf16.msra.mxu0 0
    %1071 = vmatprep.subr.bf16.mxu0 0
    %1072 = vmatpush1.bf16.msra.mxu0 0
    %1073 = vmatprep.subr.bf16.mxu0 0
    %1074 = vmatpush1.bf16.msra.mxu0 0
    %1075 = vmatprep.mubr.bf16.mxu0 0
    %1076 = vmatmul.mubr.bf16.gmra.mrb[0].mxu0 %v954
    %v1077 = vpop.f32.mrb[0].mxu0
    %v1078 = vadd.f32 0.0, %v1077
    %v1079 = vpop.f32.mrb[0].mxu0
    %v1080 = vpop.f32.mrb[0].mxu0
    %v1081 = vadd.f32 0.0, %v1080
    %v1082 = vpop.f32.mrb[0].mxu0
    %1083 = vmatprep.mubr.bf16.mxu0 0
    %1084 = vmatmul.mubr.bf16.gmra.mrb[0].mxu0 %v957
    %v1085 = vpop.f32.mrb[0].mxu0
    %v1086 = vadd.f32 0.0, %v1085
    %v1087 = vpop.f32.mrb[0].mxu0
    %v1088 = vpop.f32.mrb[0].mxu0
    %v1089 = vadd.f32 0.0, %v1088
    %v1090 = vpop.f32.mrb[0].mxu0
    %1091 = vmatprep.mubr.bf16.mxu0 0
    %1092 = vmatmul.mubr.bf16.gmra.mrb[0].mxu0 %v960
    %v1093 = vpop.f32.mrb[0].mxu0
    %v1094 = vadd.f32 0.0, %v1093
    %v1095 = vpop.f32.mrb[0].mxu0
    %v1096 = vpop.f32.mrb[0].mxu0
    %v1097 = vadd.f32 0.0, %v1096
    %v1098 = vpop.f32.mrb[0].mxu0
    %1099 = vmatprep.mubr.bf16.mxu0 0
    %1100 = vmatmul.mubr.bf16.gmra.mrb[0].mxu0 %v963
    %v1101 = vpop.f32.mrb[0].mxu0
    %v1102 = vadd.f32 0.0, %v1101
    %v1103 = vpop.f32.mrb[0].mxu0
    %v1104 = vpop.f32.mrb[0].mxu0
    %v1105 = vadd.f32 0.0, %v1104
    %v1106 = vpop.f32.mrb[0].mxu0
    %1107 = vdwg.mxu0
    %v1108 = vpack.c.bf16 %v1081, %v1078
    %v1109 = vpack.c.bf16 %v1089, %v1086
    %v1110 = vpack.c.bf16 %v1097, %v1094
    %v1111 = vpack.c.bf16 %v1105, %v1102
    %s1112 = scalar_lea.vmem [#allocation4], 16
    %v1113 = vld [vmem:[%s1112] sm:$0xf]
    %v1114 = vld [vmem:[%s1112 + $0x4] sm:$0xf]
    %v1117 = vunpack.c.l.b16 %v1113
    %v1118 = vunpack.c.l.b16 %v1114
    %v1119 = vpack.c.b16 %v1118, %v1117
    %1121 = vmatprep.subr.bf16.mxu0 0
    %1122 = vmatpush1.bf16.msra.mxu0 %v1119
    %1123 = vmatprep.subr.bf16.mxu0 0
    %1124 = vmatpush1.bf16.msra.mxu0 0
    %1125 = vmatprep.subr.bf16.mxu0 0
    %1126 = vmatpush1.bf16.msra.mxu0 0
    %1127 = vmatprep.subr.bf16.mxu0 0
    %1128 = vmatpush1.bf16.msra.mxu0 0
    %1129 = vmatprep.subr.bf16.mxu0 0
    %1130 = vmatpush1.bf16.msra.mxu0 0
    %1131 = vmatprep.subr.bf16.mxu0 0
    %1132 = vmatpush1.bf16.msra.mxu0 0
    %1133 = vmatprep.subr.bf16.mxu0 0
    %1134 = vmatpush1.bf16.msra.mxu0 0
    %1135 = vmatprep.subr.bf16.mxu0 0
    %1136 = vmatpush1.bf16.msra.mxu0 0
    %1137 = vmatprep.subr.bf16.mxu0 0
    %1138 = vmatpush1.bf16.msra.mxu0 0
    %1139 = vmatprep.subr.bf16.mxu0 0
    %1140 = vmatpush1.bf16.msra.mxu0 0
    %1141 = vmatprep.subr.bf16.mxu0 0
    %1142 = vmatpush1.bf16.msra.mxu0 0
    %1143 = vmatprep.subr.bf16.mxu0 0
    %1144 = vmatpush1.bf16.msra.mxu0 0
    %1145 = vmatprep.subr.bf16.mxu0 0
    %1146 = vmatpush1.bf16.msra.mxu0 0
    %1147 = vmatprep.subr.bf16.mxu0 0
    %1148 = vmatpush1.bf16.msra.mxu0 0
    %1149 = vmatprep.subr.bf16.mxu0 0
    %1150 = vmatpush1.bf16.msra.mxu0 0
    %1151 = vmatprep.subr.bf16.mxu0 0
    %1152 = vmatpush1.bf16.msra.mxu0 0
    %1153 = vmatprep.mubr.bf16.mxu0 0
    %1154 = vmatmul.mubr.bf16.gmra.mrb[0].mxu0 %v954
    %v1155 = vpop.f32.mrb[0].mxu0
    %v1156 = vadd.f32 0.0, %v1155
    %v1157 = vpop.f32.mrb[0].mxu0
    %v1158 = vpop.f32.mrb[0].mxu0
    %v1159 = vadd.f32 0.0, %v1158
    %v1160 = vpop.f32.mrb[0].mxu0
    %1161 = vmatprep.mubr.bf16.mxu0 0
    %1162 = vmatmul.mubr.bf16.gmra.mrb[0].mxu0 %v957
    %v1163 = vpop.f32.mrb[0].mxu0
    %v1164 = vadd.f32 0.0, %v1163
    %v1165 = vpop.f32.mrb[0].mxu0
    %v1166 = vpop.f32.mrb[0].mxu0
    %v1167 = vadd.f32 0.0, %v1166
    %v1168 = vpop.f32.mrb[0].mxu0
    %1169 = vmatprep.mubr.bf16.mxu0 0
    %1170 = vmatmul.mubr.bf16.gmra.mrb[0].mxu0 %v960
    %v1171 = vpop.f32.mrb[0].mxu0
    %v1172 = vadd.f32 0.0, %v1171
    %v1173 = vpop.f32.mrb[0].mxu0
    %v1174 = vpop.f32.mrb[0].mxu0
    %v1175 = vadd.f32 0.0, %v1174
    %v1176 = vpop.f32.mrb[0].mxu0
    %1177 = vmatprep.mubr.bf16.mxu0 0
    %1178 = vmatmul.mubr.bf16.gmra.mrb[0].mxu0 %v963
    %v1179 = vpop.f32.mrb[0].mxu0
    %v1180 = vadd.f32 0.0, %v1179
    %v1181 = vpop.f32.mrb[0].mxu0
    %v1182 = vpop.f32.mrb[0].mxu0
    %v1183 = vadd.f32 0.0, %v1182
    %v1184 = vpop.f32.mrb[0].mxu0
    %1185 = vdwg.mxu0
    %v1186 = vpack.c.bf16 %v1159, %v1156
    %v1187 = vpack.c.bf16 %v1167, %v1164
    %v1188 = vpack.c.bf16 %v1175, %v1172
    %v1189 = vpack.c.bf16 %v1183, %v1180
    %v1190 = vld [vmem:[%s8] sm:$0xff]
    %v1191 = vld [vmem:[%s8 + $0x8] sm:$0xff]
    %v1192 = vld [vmem:[%s8 + $0x10] sm:$0xff]
    %v1193 = vld [vmem:[%s8 + $0x18] sm:$0xff]
    %v1194 = vld [vmem:[%s8 + $0x20] sm:$0xff]
    %v1195 = vld [vmem:[%s8 + $0x28] sm:$0xff]
    %v1196 = vld [vmem:[%s8 + $0x30] sm:$0xff]
    %v1197 = vld [vmem:[%s8 + $0x38] sm:$0xff]
    %v1198 = vld [vmem:[%s13] sm:$0xff]
    %v1199 = vld [vmem:[%s13 + $0x8] sm:$0xff]
    %v1200 = vld [vmem:[%s13 + $0x10] sm:$0xff]
    %v1201 = vld [vmem:[%s13 + $0x18] sm:$0xff]
    %v1202 = vld [vmem:[%s13 + $0x20] sm:$0xff]
    %v1203 = vld [vmem:[%s13 + $0x28] sm:$0xff]
    %v1204 = vld [vmem:[%s13 + $0x30] sm:$0xff]
    %v1205 = vld [vmem:[%s13 + $0x38] sm:$0xff]
    %v1214 = vunpack.c.l.b16 %v1190
    %v1215 = vunpack.c.h.b16 %v1190
    %v1216 = vunpack.c.l.b16 %v1191
    %v1217 = vunpack.c.h.b16 %v1191
    %v1218 = vunpack.c.l.b16 %v1192
    %v1219 = vunpack.c.h.b16 %v1192
    %v1220 = vunpack.c.l.b16 %v1193
    %v1221 = vunpack.c.h.b16 %v1193
    %v1222 = vunpack.c.l.b16 %v1194
    %v1223 = vunpack.c.h.b16 %v1194
    %v1224 = vunpack.c.l.b16 %v1195
    %v1225 = vunpack.c.h.b16 %v1195
    %v1226 = vunpack.c.l.b16 %v1196
    %v1227 = vunpack.c.h.b16 %v1196
    %v1228 = vunpack.c.l.b16 %v1197
    %v1229 = vunpack.c.h.b16 %v1197
    %v1230 = vpack.c.b16 %v1216, %v1214
    %v1231 = vpack.c.b16 %v1217, %v1215
    %v1232 = vpack.c.b16 %v1220, %v1218
    %v1233 = vpack.c.b16 %v1221, %v1219
    %v1234 = vpack.c.b16 %v1224, %v1222
    %v1235 = vpack.c.b16 %v1225, %v1223
    %v1236 = vpack.c.b16 %v1228, %v1226
    %v1237 = vpack.c.b16 %v1229, %v1227
    %v1243 = vsel %vm478, %v1231, 0
    %v1246 = vsel %vm478, %v1233, 0
    %v1249 = vsel %vm478, %v1235, 0
    %v1252 = vsel %vm478, %v1237, 0
    %1254 = vmatprep.subr.bf16.mxu0 0
    %1255 = vmatpush1.bf16.msra.mxu0 %v1030
    %1256 = vmatprep.subr.bf16.mxu0 0
    %1257 = vmatpush1.bf16.msra.mxu0 %v1031
    %1258 = vmatprep.subr.bf16.mxu0 0
    %1259 = vmatpush1.bf16.msra.mxu0 %v1032
    %1260 = vmatprep.subr.bf16.mxu0 0
    %1261 = vmatpush1.bf16.msra.mxu0 %v1033
    %1262 = vmatprep.subr.bf16.mxu0 0
    %1263 = vmatpush1.bf16.msra.mxu0 %v1108
    %1264 = vmatprep.subr.bf16.mxu0 0
    %1265 = vmatpush1.bf16.msra.mxu0 %v1109
    %1266 = vmatprep.subr.bf16.mxu0 0
    %1267 = vmatpush1.bf16.msra.mxu0 %v1110
    %1268 = vmatprep.subr.bf16.mxu0 0
    %1269 = vmatpush1.bf16.msra.mxu0 %v1111
    %1270 = vmatprep.subr.bf16.mxu0 0
    %1271 = vmatpush1.bf16.msra.mxu0 %v1186
    %1272 = vmatprep.subr.bf16.mxu0 0
    %1273 = vmatpush1.bf16.msra.mxu0 %v1187
    %1274 = vmatprep.subr.bf16.mxu0 0
    %1275 = vmatpush1.bf16.msra.mxu0 %v1188
    %1276 = vmatprep.subr.bf16.mxu0 0
    %1277 = vmatpush1.bf16.msra.mxu0 %v1189
    %1278 = vmatprep.subr.bf16.mxu0 0
    %1279 = vmatpush1.bf16.msra.mxu0 0
    %1280 = vmatprep.subr.bf16.mxu0 0
    %1281 = vmatpush1.bf16.msra.mxu0 0
    %1282 = vmatprep.subr.bf16.mxu0 0
    %1283 = vmatpush1.bf16.msra.mxu0 0
    %1284 = vmatprep.subr.bf16.mxu0 0
    %1285 = vmatpush1.bf16.msra.mxu0 0
    %1286 = vmatprep.mubr.bf16.mxu0 %v1243
    %1287 = vmatmul.mubr.bf16.gmra.mrb[0].mxu0 %v1230
    %v1288 = vpop.f32.mrb[0].mxu0
    %v1289 = vadd.f32 %v1198, %v1288
    %v1290 = vpop.f32.mrb[0].mxu0
    %v1291 = vpop.f32.mrb[0].mxu0
    %v1292 = vadd.f32 %v1199, %v1291
    %v1293 = vpop.f32.mrb[0].mxu0
    %1294 = vmatprep.mubr.bf16.mxu0 %v1246
    %1295 = vmatmul.mubr.bf16.gmra.mrb[0].mxu0 %v1232
    %v1296 = vpop.f32.mrb[0].mxu0
    %v1297 = vadd.f32 %v1200, %v1296
    %v1298 = vpop.f32.mrb[0].mxu0
    %v1299 = vpop.f32.mrb[0].mxu0
    %v1300 = vadd.f32 %v1201, %v1299
    %v1301 = vpop.f32.mrb[0].mxu0
    %1302 = vmatprep.mubr.bf16.mxu0 %v1249
    %1303 = vmatmul.mubr.bf16.gmra.mrb[0].mxu0 %v1234
    %v1304 = vpop.f32.mrb[0].mxu0
    %v1305 = vadd.f32 %v1202, %v1304
    %v1306 = vpop.f32.mrb[0].mxu0
    %v1307 = vpop.f32.mrb[0].mxu0
    %v1308 = vadd.f32 %v1203, %v1307
    %v1309 = vpop.f32.mrb[0].mxu0
    %1310 = vmatprep.mubr.bf16.mxu0 %v1252
    %1311 = vmatmul.mubr.bf16.gmra.mrb[0].mxu0 %v1236
    %v1312 = vpop.f32.mrb[0].mxu0
    %v1313 = vadd.f32 %v1204, %v1312
    %v1314 = vpop.f32.mrb[0].mxu0
    %v1315 = vpop.f32.mrb[0].mxu0
    %v1316 = vadd.f32 %v1205, %v1315
    %v1317 = vpop.f32.mrb[0].mxu0
    %1318 = vdwg.mxu0
    %v1319 = vmax.f32 %v1289, 0.0
    %v1320 = vmax.f32 %v1292, 0.0
    %v1321 = vmax.f32 %v1297, 0.0
    %v1322 = vmax.f32 %v1300, 0.0
    %v1323 = vmax.f32 %v1305, 0.0
    %v1324 = vmax.f32 %v1308, 0.0
    %v1325 = vmax.f32 %v1313, 0.0
    %v1326 = vmax.f32 %v1316, 0.0
    %v1327 = vpack.c.bf16 %v1320, %v1319
    %v1328 = vpack.c.bf16 %v1322, %v1321
    %v1329 = vpack.c.bf16 %v1324, %v1323
    %v1330 = vpack.c.bf16 %v1326, %v1325
    %v1331 = vld [vmem:[#allocation6] sm:$0xf]
    %v1332 = vld [vmem:[#allocation6 + $0x4] sm:$0xf]
    %v1333 = vld [vmem:[#allocation6 + $0x8] sm:$0xf]
    %v1334 = vld [vmem:[#allocation6 + $0xc] sm:$0xf]
    %v1339 = vunpack.c.l.b16 %v1331
    %v1340 = vunpack.c.l.b16 %v1332
    %v1341 = vunpack.c.l.b16 %v1333
    %v1342 = vunpack.c.l.b16 %v1334
    %v1343 = vpack.c.b16 %v1340, %v1339
    %v1344 = vpack.c.b16 %v1342, %v1341
    %vm1347 = vcmask 261120
    %v1349 = vsel %vm1347, %v1327, 0
    %v1352 = vsel %vm1347, %v1328, 0
    %v1355 = vsel %vm1347, %v1329, 0
    %v1358 = vsel %vm1347, %v1330, 0
    %1360 = vmatprep.subr.bf16.mxu0 0
    %1361 = vmatpush1.bf16.msra.mxu0 %v1343
    %1362 = vmatprep.subr.bf16.mxu0 0
    %1363 = vmatpush1.bf16.msra.mxu0 %v1344
    %1364 = vmatprep.subr.bf16.mxu0 0
    %1365 = vmatpush1.bf16.msra.mxu0 0
    %1366 = vmatprep.subr.bf16.mxu0 0
    %1367 = vmatpush1.bf16.msra.mxu0 0
    %1368 = vmatprep.subr.bf16.mxu0 0
    %1369 = vmatpush1.bf16.msra.mxu0 0
    %1370 = vmatprep.subr.bf16.mxu0 0
    %1371 = vmatpush1.bf16.msra.mxu0 0
    %1372 = vmatprep.subr.bf16.mxu0 0
    %1373 = vmatpush1.bf16.msra.mxu0 0
    %1374 = vmatprep.subr.bf16.mxu0 0
    %1375 = vmatpush1.bf16.msra.mxu0 0
    %1376 = vmatprep.subr.bf16.mxu0 0
    %1377 = vmatpush1.bf16.msra.mxu0 0
    %1378 = vmatprep.subr.bf16.mxu0 0
    %1379 = vmatpush1.bf16.msra.mxu0 0
    %1380 = vmatprep.subr.bf16.mxu0 0
    %1381 = vmatpush1.bf16.msra.mxu0 0
    %1382 = vmatprep.subr.bf16.mxu0 0
    %1383 = vmatpush1.bf16.msra.mxu0 0
    %1384 = vmatprep.subr.bf16.mxu0 0
    %1385 = vmatpush1.bf16.msra.mxu0 0
    %1386 = vmatprep.subr.bf16.mxu0 0
    %1387 = vmatpush1.bf16.msra.mxu0 0
    %1388 = vmatprep.subr.bf16.mxu0 0
    %1389 = vmatpush1.bf16.msra.mxu0 0
    %1390 = vmatprep.subr.bf16.mxu0 0
    %1391 = vmatpush1.bf16.msra.mxu0 0
    %1392 = vmatprep.mubr.bf16.mxu0 0
    %1393 = vmatmul.mubr.bf16.gmra.mrb[0].mxu0 %v1349
    %v1394 = vpop.f32.mrb[0].mxu0
    %v1395 = vadd.f32 0.0, %v1394
    %v1396 = vpop.f32.mrb[0].mxu0
    %v1397 = vpop.f32.mrb[0].mxu0
    %v1398 = vadd.f32 0.0, %v1397
    %v1399 = vpop.f32.mrb[0].mxu0
    %1400 = vmatprep.mubr.bf16.mxu0 0
    %1401 = vmatmul.mubr.bf16.gmra.mrb[0].mxu0 %v1352
    %v1402 = vpop.f32.mrb[0].mxu0
    %v1403 = vadd.f32 0.0, %v1402
    %v1404 = vpop.f32.mrb[0].mxu0
    %v1405 = vpop.f32.mrb[0].mxu0
    %v1406 = vadd.f32 0.0, %v1405
    %v1407 = vpop.f32.mrb[0].mxu0
    %1408 = vmatprep.mubr.bf16.mxu0 0
    %1409 = vmatmul.mubr.bf16.gmra.mrb[0].mxu0 %v1355
    %v1410 = vpop.f32.mrb[0].mxu0
    %v1411 = vadd.f32 0.0, %v1410
    %v1412 = vpop.f32.mrb[0].mxu0
    %v1413 = vpop.f32.mrb[0].mxu0
    %v1414 = vadd.f32 0.0, %v1413
    %v1415 = vpop.f32.mrb[0].mxu0
    %1416 = vmatprep.mubr.bf16.mxu0 0
    %1417 = vmatmul.mubr.bf16.gmra.mrb[0].mxu0 %v1358
    %v1418 = vpop.f32.mrb[0].mxu0
    %v1419 = vadd.f32 0.0, %v1418
    %v1420 = vpop.f32.mrb[0].mxu0
    %v1421 = vpop.f32.mrb[0].mxu0
    %v1422 = vadd.f32 0.0, %v1421
    %v1423 = vpop.f32.mrb[0].mxu0
    %1424 = vdwg.mxu0
    %v1425 = vpack.c.bf16 %v1398, %v1395
    %v1426 = vpack.c.bf16 %v1406, %v1403
    %v1427 = vpack.c.bf16 %v1414, %v1411
    %v1428 = vpack.c.bf16 %v1422, %v1419
    %s1429 = scalar_lea.vmem [#allocation6], 16
    %v1430 = vld [vmem:[%s1429] sm:$0xf]
    %v1431 = vld [vmem:[%s1429 + $0x4] sm:$0xf]
    %v1432 = vld [vmem:[%s1429 + $0x8] sm:$0xf]
    %v1433 = vld [vmem:[%s1429 + $0xc] sm:$0xf]
    %v1438 = vunpack.c.l.b16 %v1430
    %v1439 = vunpack.c.l.b16 %v1431
    %v1440 = vunpack.c.l.b16 %v1432
    %v1441 = vunpack.c.l.b16 %v1433
    %v1442 = vpack.c.b16 %v1439, %v1438
    %v1443 = vpack.c.b16 %v1441, %v1440
    %1446 = vmatprep.subr.bf16.mxu0 0
    %1447 = vmatpush1.bf16.msra.mxu0 %v1442
    %1448 = vmatprep.subr.bf16.mxu0 0
    %1449 = vmatpush1.bf16.msra.mxu0 %v1443
    %1450 = vmatprep.subr.bf16.mxu0 0
    %1451 = vmatpush1.bf16.msra.mxu0 0
    %1452 = vmatprep.subr.bf16.mxu0 0
    %1453 = vmatpush1.bf16.msra.mxu0 0
    %1454 = vmatprep.subr.bf16.mxu0 0
    %1455 = vmatpush1.bf16.msra.mxu0 0
    %1456 = vmatprep.subr.bf16.mxu0 0
    %1457 = vmatpush1.bf16.msra.mxu0 0
    %1458 = vmatprep.subr.bf16.mxu0 0
    %1459 = vmatpush1.bf16.msra.mxu0 0
    %1460 = vmatprep.subr.bf16.mxu0 0
    %1461 = vmatpush1.bf16.msra.mxu0 0
    %1462 = vmatprep.subr.bf16.mxu0 0
    %1463 = vmatpush1.bf16.msra.mxu0 0
    %1464 = vmatprep.subr.bf16.mxu0 0
    %1465 = vmatpush1.bf16.msra.mxu0 0
    %1466 = vmatprep.subr.bf16.mxu0 0
    %1467 = vmatpush1.bf16.msra.mxu0 0
    %1468 = vmatprep.subr.bf16.mxu0 0
    %1469 = vmatpush1.bf16.msra.mxu0 0
    %1470 = vmatprep.subr.bf16.mxu0 0
    %1471 = vmatpush1.bf16.msra.mxu0 0
    %1472 = vmatprep.subr.bf16.mxu0 0
    %1473 = vmatpush1.bf16.msra.mxu0 0
    %1474 = vmatprep.subr.bf16.mxu0 0
    %1475 = vmatpush1.bf16.msra.mxu0 0
    %1476 = vmatprep.subr.bf16.mxu0 0
    %1477 = vmatpush1.bf16.msra.mxu0 0
    %1478 = vmatprep.mubr.bf16.mxu0 0
    %1479 = vmatmul.mubr.bf16.gmra.mrb[0].mxu0 %v1349
    %v1480 = vpop.f32.mrb[0].mxu0
    %v1481 = vadd.f32 0.0, %v1480
    %v1482 = vpop.f32.mrb[0].mxu0
    %v1483 = vpop.f32.mrb[0].mxu0
    %v1484 = vadd.f32 0.0, %v1483
    %v1485 = vpop.f32.mrb[0].mxu0
    %1486 = vmatprep.mubr.bf16.mxu0 0
    %1487 = vmatmul.mubr.bf16.gmra.mrb[0].mxu0 %v1352
    %v1488 = vpop.f32.mrb[0].mxu0
    %v1489 = vadd.f32 0.0, %v1488
    %v1490 = vpop.f32.mrb[0].mxu0
    %v1491 = vpop.f32.mrb[0].mxu0
    %v1492 = vadd.f32 0.0, %v1491
    %v1493 = vpop.f32.mrb[0].mxu0
    %1494 = vmatprep.mubr.bf16.mxu0 0
    %1495 = vmatmul.mubr.bf16.gmra.mrb[0].mxu0 %v1355
    %v1496 = vpop.f32.mrb[0].mxu0
    %v1497 = vadd.f32 0.0, %v1496
    %v1498 = vpop.f32.mrb[0].mxu0
    %v1499 = vpop.f32.mrb[0].mxu0
    %v1500 = vadd.f32 0.0, %v1499
    %v1501 = vpop.f32.mrb[0].mxu0
    %1502 = vmatprep.mubr.bf16.mxu0 0
    %1503 = vmatmul.mubr.bf16.gmra.mrb[0].mxu0 %v1358
    %v1504 = vpop.f32.mrb[0].mxu0
    %v1505 = vadd.f32 0.0, %v1504
    %v1506 = vpop.f32.mrb[0].mxu0
    %v1507 = vpop.f32.mrb[0].mxu0
    %v1508 = vadd.f32 0.0, %v1507
    %v1509 = vpop.f32.mrb[0].mxu0
    %1510 = vdwg.mxu0
    %v1511 = vpack.c.bf16 %v1484, %v1481
    %v1512 = vpack.c.bf16 %v1492, %v1489
    %v1513 = vpack.c.bf16 %v1500, %v1497
    %v1514 = vpack.c.bf16 %v1508, %v1505
    %s1515 = scalar_lea.vmem [#allocation6], 32
    %v1516 = vld [vmem:[%s1515] sm:$0xf]
    %v1517 = vld [vmem:[%s1515 + $0x4] sm:$0xf]
    %v1518 = vld [vmem:[%s1515 + $0x8] sm:$0xf]
    %v1519 = vld [vmem:[%s1515 + $0xc] sm:$0xf]
    %v1524 = vunpack.c.l.b16 %v1516
    %v1525 = vunpack.c.l.b16 %v1517
    %v1526 = vunpack.c.l.b16 %v1518
    %v1527 = vunpack.c.l.b16 %v1519
    %v1528 = vpack.c.b16 %v1525, %v1524
    %v1529 = vpack.c.b16 %v1527, %v1526
    %1532 = vmatprep.subr.bf16.mxu0 0
    %1533 = vmatpush1.bf16.msra.mxu0 %v1528
    %1534 = vmatprep.subr.bf16.mxu0 0
    %1535 = vmatpush1.bf16.msra.mxu0 %v1529
    %1536 = vmatprep.subr.bf16.mxu0 0
    %1537 = vmatpush1.bf16.msra.mxu0 0
    %1538 = vmatprep.subr.bf16.mxu0 0
    %1539 = vmatpush1.bf16.msra.mxu0 0
    %1540 = vmatprep.subr.bf16.mxu0 0
    %1541 = vmatpush1.bf16.msra.mxu0 0
    %1542 = vmatprep.subr.bf16.mxu0 0
    %1543 = vmatpush1.bf16.msra.mxu0 0
    %1544 = vmatprep.subr.bf16.mxu0 0
    %1545 = vmatpush1.bf16.msra.mxu0 0
    %1546 = vmatprep.subr.bf16.mxu0 0
    %1547 = vmatpush1.bf16.msra.mxu0 0
    %1548 = vmatprep.subr.bf16.mxu0 0
    %1549 = vmatpush1.bf16.msra.mxu0 0
    %1550 = vmatprep.subr.bf16.mxu0 0
    %1551 = vmatpush1.bf16.msra.mxu0 0
    %1552 = vmatprep.subr.bf16.mxu0 0
    %1553 = vmatpush1.bf16.msra.mxu0 0
    %1554 = vmatprep.subr.bf16.mxu0 0
    %1555 = vmatpush1.bf16.msra.mxu0 0
    %1556 = vmatprep.subr.bf16.mxu0 0
    %1557 = vmatpush1.bf16.msra.mxu0 0
    %1558 = vmatprep.subr.bf16.mxu0 0
    %1559 = vmatpush1.bf16.msra.mxu0 0
    %1560 = vmatprep.subr.bf16.mxu0 0
    %1561 = vmatpush1.bf16.msra.mxu0 0
    %1562 = vmatprep.subr.bf16.mxu0 0
    %1563 = vmatpush1.bf16.msra.mxu0 0
    %1564 = vmatprep.mubr.bf16.mxu0 0
    %1565 = vmatmul.mubr.bf16.gmra.mrb[0].mxu0 %v1349
    %v1566 = vpop.f32.mrb[0].mxu0
    %v1567 = vadd.f32 0.0, %v1566
    %v1568 = vpop.f32.mrb[0].mxu0
    %v1569 = vpop.f32.mrb[0].mxu0
    %v1570 = vadd.f32 0.0, %v1569
    %v1571 = vpop.f32.mrb[0].mxu0
    %1572 = vmatprep.mubr.bf16.mxu0 0
    %1573 = vmatmul.mubr.bf16.gmra.mrb[0].mxu0 %v1352
    %v1574 = vpop.f32.mrb[0].mxu0
    %v1575 = vadd.f32 0.0, %v1574
    %v1576 = vpop.f32.mrb[0].mxu0
    %v1577 = vpop.f32.mrb[0].mxu0
    %v1578 = vadd.f32 0.0, %v1577
    %v1579 = vpop.f32.mrb[0].mxu0
    %1580 = vmatprep.mubr.bf16.mxu0 0
    %1581 = vmatmul.mubr.bf16.gmra.mrb[0].mxu0 %v1355
    %v1582 = vpop.f32.mrb[0].mxu0
    %v1583 = vadd.f32 0.0, %v1582
    %v1584 = vpop.f32.mrb[0].mxu0
    %v1585 = vpop.f32.mrb[0].mxu0
    %v1586 = vadd.f32 0.0, %v1585
    %v1587 = vpop.f32.mrb[0].mxu0
    %1588 = vmatprep.mubr.bf16.mxu0 0
    %1589 = vmatmul.mubr.bf16.gmra.mrb[0].mxu0 %v1358
    %v1590 = vpop.f32.mrb[0].mxu0
    %v1591 = vadd.f32 0.0, %v1590
    %v1592 = vpop.f32.mrb[0].mxu0
    %v1593 = vpop.f32.mrb[0].mxu0
    %v1594 = vadd.f32 0.0, %v1593
    %v1595 = vpop.f32.mrb[0].mxu0
    %1596 = vdwg.mxu0
    %v1597 = vpack.c.bf16 %v1570, %v1567
    %v1598 = vpack.c.bf16 %v1578, %v1575
    %v1599 = vpack.c.bf16 %v1586, %v1583
    %v1600 = vpack.c.bf16 %v1594, %v1591
    %v1601 = vld [vmem:[#allocation12] sm:$0xff]
    %v1602 = vld [vmem:[#allocation12 + $0x8] sm:$0xff]
    %v1603 = vld [vmem:[#allocation12 + $0x10] sm:$0xff]
    %v1604 = vld [vmem:[#allocation12 + $0x18] sm:$0xff]
    %v1605 = vld [vmem:[#allocation12 + $0x20] sm:$0xff]
    %v1606 = vld [vmem:[#allocation12 + $0x28] sm:$0xff]
    %v1607 = vld [vmem:[#allocation12 + $0x30] sm:$0xff]
    %v1608 = vld [vmem:[#allocation12 + $0x38] sm:$0xff]
    %v1609 = vld [vmem:[#allocation13] sm:$0xff]
    %v1610 = vld [vmem:[#allocation13 + $0x8] sm:$0xff]
    %v1611 = vld [vmem:[#allocation13 + $0x10] sm:$0xff]
    %v1612 = vld [vmem:[#allocation13 + $0x18] sm:$0xff]
    %v1613 = vld [vmem:[#allocation13 + $0x20] sm:$0xff]
    %v1614 = vld [vmem:[#allocation13 + $0x28] sm:$0xff]
    %v1615 = vld [vmem:[#allocation13 + $0x30] sm:$0xff]
    %v1616 = vld [vmem:[#allocation13 + $0x38] sm:$0xff]
    %v1625 = vunpack.c.l.b16 %v1601
    %v1626 = vunpack.c.h.b16 %v1601
    %v1627 = vunpack.c.l.b16 %v1602
    %v1628 = vunpack.c.h.b16 %v1602
    %v1629 = vunpack.c.l.b16 %v1603
    %v1630 = vunpack.c.h.b16 %v1603
    %v1631 = vunpack.c.l.b16 %v1604
    %v1632 = vunpack.c.h.b16 %v1604
    %v1633 = vunpack.c.l.b16 %v1605
    %v1634 = vunpack.c.h.b16 %v1605
    %v1635 = vunpack.c.l.b16 %v1606
    %v1636 = vunpack.c.h.b16 %v1606
    %v1637 = vunpack.c.l.b16 %v1607
    %v1638 = vunpack.c.h.b16 %v1607
    %v1639 = vunpack.c.l.b16 %v1608
    %v1640 = vunpack.c.h.b16 %v1608
    %v1641 = vpack.c.b16 %v1627, %v1625
    %v1642 = vpack.c.b16 %v1628, %v1626
    %v1643 = vpack.c.b16 %v1631, %v1629
    %v1644 = vpack.c.b16 %v1632, %v1630
    %v1645 = vpack.c.b16 %v1635, %v1633
    %v1646 = vpack.c.b16 %v1636, %v1634
    %v1647 = vpack.c.b16 %v1639, %v1637
    %v1648 = vpack.c.b16 %v1640, %v1638
    %v1654 = vsel %vm478, %v1642, 0
    %v1657 = vsel %vm478, %v1644, 0
    %v1660 = vsel %vm478, %v1646, 0
    %v1663 = vsel %vm478, %v1648, 0
    %1665 = vmatprep.subr.bf16.mxu0 0
    %1666 = vmatpush1.bf16.msra.mxu0 %v1425
    %1667 = vmatprep.subr.bf16.mxu0 0
    %1668 = vmatpush1.bf16.msra.mxu0 %v1426
    %1669 = vmatprep.subr.bf16.mxu0 0
    %1670 = vmatpush1.bf16.msra.mxu0 %v1427
    %1671 = vmatprep.subr.bf16.mxu0 0
    %1672 = vmatpush1.bf16.msra.mxu0 %v1428
    %1673 = vmatprep.subr.bf16.mxu0 0
    %1674 = vmatpush1.bf16.msra.mxu0 %v1511
    %1675 = vmatprep.subr.bf16.mxu0 0
    %1676 = vmatpush1.bf16.msra.mxu0 %v1512
    %1677 = vmatprep.subr.bf16.mxu0 0
    %1678 = vmatpush1.bf16.msra.mxu0 %v1513
    %1679 = vmatprep.subr.bf16.mxu0 0
    %1680 = vmatpush1.bf16.msra.mxu0 %v1514
    %1681 = vmatprep.subr.bf16.mxu0 0
    %1682 = vmatpush1.bf16.msra.mxu0 %v1597
    %1683 = vmatprep.subr.bf16.mxu0 0
    %1684 = vmatpush1.bf16.msra.mxu0 %v1598
    %1685 = vmatprep.subr.bf16.mxu0 0
    %1686 = vmatpush1.bf16.msra.mxu0 %v1599
    %1687 = vmatprep.subr.bf16.mxu0 0
    %1688 = vmatpush1.bf16.msra.mxu0 %v1600
    %1689 = vmatprep.subr.bf16.mxu0 0
    %1690 = vmatpush1.bf16.msra.mxu0 0
    %1691 = vmatprep.subr.bf16.mxu0 0
    %1692 = vmatpush1.bf16.msra.mxu0 0
    %1693 = vmatprep.subr.bf16.mxu0 0
    %1694 = vmatpush1.bf16.msra.mxu0 0
    %1695 = vmatprep.subr.bf16.mxu0 0
    %1696 = vmatpush1.bf16.msra.mxu0 0
    %1697 = vmatprep.mubr.bf16.mxu0 %v1654
    %1698 = vmatmul.mubr.bf16.gmra.mrb[0].mxu0 %v1641
    %v1699 = vpop.f32.mrb[0].mxu0
    %v1700 = vadd.f32 %v1609, %v1699
    %v1701 = vpop.f32.mrb[0].mxu0
    %v1702 = vpop.f32.mrb[0].mxu0
    %v1703 = vadd.f32 %v1610, %v1702
    %v1704 = vpop.f32.mrb[0].mxu0
    %1705 = vmatprep.mubr.bf16.mxu0 %v1657
    %1706 = vmatmul.mubr.bf16.gmra.mrb[0].mxu0 %v1643
    %v1707 = vpop.f32.mrb[0].mxu0
    %v1708 = vadd.f32 %v1611, %v1707
    %v1709 = vpop.f32.mrb[0].mxu0
    %v1710 = vpop.f32.mrb[0].mxu0
    %v1711 = vadd.f32 %v1612, %v1710
    %v1712 = vpop.f32.mrb[0].mxu0
    %1713 = vmatprep.mubr.bf16.mxu0 %v1660
    %1714 = vmatmul.mubr.bf16.gmra.mrb[0].mxu0 %v1645
    %v1715 = vpop.f32.mrb[0].mxu0
    %v1716 = vadd.f32 %v1613, %v1715
    %v1717 = vpop.f32.mrb[0].mxu0
    %v1718 = vpop.f32.mrb[0].mxu0
    %v1719 = vadd.f32 %v1614, %v1718
    %v1720 = vpop.f32.mrb[0].mxu0
    %1721 = vmatprep.mubr.bf16.mxu0 %v1663
    %1722 = vmatmul.mubr.bf16.gmra.mrb[0].mxu0 %v1647
    %v1723 = vpop.f32.mrb[0].mxu0
    %v1724 = vadd.f32 %v1615, %v1723
    %v1725 = vpop.f32.mrb[0].mxu0
    %v1726 = vpop.f32.mrb[0].mxu0
    %v1727 = vadd.f32 %v1616, %v1726
    %v1728 = vpop.f32.mrb[0].mxu0
    %1729 = vdwg.mxu0
    %v1730 = vmax.f32 %v1700, 0.0
    %v1731 = vmax.f32 %v1703, 0.0
    %v1732 = vmax.f32 %v1708, 0.0
    %v1733 = vmax.f32 %v1711, 0.0
    %v1734 = vmax.f32 %v1716, 0.0
    %v1735 = vmax.f32 %v1719, 0.0
    %v1736 = vmax.f32 %v1724, 0.0
    %v1737 = vmax.f32 %v1727, 0.0
    %v1738 = vpack.c.bf16 %v1731, %v1730
    %v1739 = vpack.c.bf16 %v1733, %v1732
    %v1740 = vpack.c.bf16 %v1735, %v1734
    %v1741 = vpack.c.bf16 %v1737, %v1736
    %v1742 = vld [vmem:[#allocation7] sm:$0xf]
    %v1743 = vld [vmem:[#allocation7 + $0x4] sm:$0xf]
    %v1744 = vld [vmem:[#allocation7 + $0x8] sm:$0xf]
    %v1745 = vld [vmem:[#allocation7 + $0xc] sm:$0xf]
    %v1746 = vld [vmem:[#allocation7 + $0x10] sm:$0xf]
    %v1747 = vld [vmem:[#allocation7 + $0x14] sm:$0xf]
    %v1748 = vld [vmem:[#allocation7 + $0x18] sm:$0xf]
    %v1749 = vld [vmem:[#allocation7 + $0x1c] sm:$0xf]
    %v1758 = vunpack.c.l.b16 %v1742
    %v1759 = vunpack.c.l.b16 %v1743
    %v1760 = vunpack.c.l.b16 %v1744
    %v1761 = vunpack.c.l.b16 %v1745
    %v1762 = vunpack.c.l.b16 %v1746
    %v1763 = vunpack.c.l.b16 %v1747
    %v1764 = vunpack.c.l.b16 %v1748
    %v1765 = vunpack.c.l.b16 %v1749
    %v1766 = vpack.c.b16 %v1759, %v1758
    %v1767 = vpack.c.b16 %v1761, %v1760
    %v1768 = vpack.c.b16 %v1763, %v1762
    %v1769 = vpack.c.b16 %v1765, %v1764
    %v1775 = vsel %vm478, %v1738, 0
    %v1778 = vsel %vm478, %v1739, 0
    %v1781 = vsel %vm478, %v1740, 0
    %v1784 = vsel %vm478, %v1741, 0
    %1786 = vmatprep.subr.bf16.mxu0 0
    %1787 = vmatpush1.bf16.msra.mxu0 %v1766
    %1788 = vmatprep.subr.bf16.mxu0 0
    %1789 = vmatpush1.bf16.msra.mxu0 %v1767
    %1790 = vmatprep.subr.bf16.mxu0 0
    %1791 = vmatpush1.bf16.msra.mxu0 %v1768
    %1792 = vmatprep.subr.bf16.mxu0 0
    %1793 = vmatpush1.bf16.msra.mxu0 %v1769
    %1794 = vmatprep.subr.bf16.mxu0 0
    %1795 = vmatpush1.bf16.msra.mxu0 0
    %1796 = vmatprep.subr.bf16.mxu0 0
    %1797 = vmatpush1.bf16.msra.mxu0 0
    %1798 = vmatprep.subr.bf16.mxu0 0
    %1799 = vmatpush1.bf16.msra.mxu0 0
    %1800 = vmatprep.subr.bf16.mxu0 0
    %1801 = vmatpush1.bf16.msra.mxu0 0
    %1802 = vmatprep.subr.bf16.mxu0 0
    %1803 = vmatpush1.bf16.msra.mxu0 0
    %1804 = vmatprep.subr.bf16.mxu0 0
    %1805 = vmatpush1.bf16.msra.mxu0 0
    %1806 = vmatprep.subr.bf16.mxu0 0
    %1807 = vmatpush1.bf16.msra.mxu0 0
    %1808 = vmatprep.subr.bf16.mxu0 0
    %1809 = vmatpush1.bf16.msra.mxu0 0
    %1810 = vmatprep.subr.bf16.mxu0 0
    %1811 = vmatpush1.bf16.msra.mxu0 0
    %1812 = vmatprep.subr.bf16.mxu0 0
    %1813 = vmatpush1.bf16.msra.mxu0 0
    %1814 = vmatprep.subr.bf16.mxu0 0
    %1815 = vmatpush1.bf16.msra.mxu0 0
    %1816 = vmatprep.subr.bf16.mxu0 0
    %1817 = vmatpush1.bf16.msra.mxu0 0
    %1818 = vmatprep.mubr.bf16.mxu0 0
    %1819 = vmatmul.mubr.bf16.gmra.mrb[0].mxu0 %v1775
    %v1820 = vpop.f32.mrb[0].mxu0
    %v1821 = vadd.f32 0.0, %v1820
    %v1822 = vpop.f32.mrb[0].mxu0
    %v1823 = vpop.f32.mrb[0].mxu0
    %v1824 = vadd.f32 0.0, %v1823
    %v1825 = vpop.f32.mrb[0].mxu0
    %1826 = vmatprep.mubr.bf16.mxu0 0
    %1827 = vmatmul.mubr.bf16.gmra.mrb[0].mxu0 %v1778
    %v1828 = vpop.f32.mrb[0].mxu0
    %v1829 = vadd.f32 0.0, %v1828
    %v1830 = vpop.f32.mrb[0].mxu0
    %v1831 = vpop.f32.mrb[0].mxu0
    %v1832 = vadd.f32 0.0, %v1831
    %v1833 = vpop.f32.mrb[0].mxu0
    %1834 = vmatprep.mubr.bf16.mxu0 0
    %1835 = vmatmul.mubr.bf16.gmra.mrb[0].mxu0 %v1781
    %v1836 = vpop.f32.mrb[0].mxu0
    %v1837 = vadd.f32 0.0, %v1836
    %v1838 = vpop.f32.mrb[0].mxu0
    %v1839 = vpop.f32.mrb[0].mxu0
    %v1840 = vadd.f32 0.0, %v1839
    %v1841 = vpop.f32.mrb[0].mxu0
    %1842 = vmatprep.mubr.bf16.mxu0 0
    %1843 = vmatmul.mubr.bf16.gmra.mrb[0].mxu0 %v1784
    %v1844 = vpop.f32.mrb[0].mxu0
    %v1845 = vadd.f32 0.0, %v1844
    %v1846 = vpop.f32.mrb[0].mxu0
    %v1847 = vpop.f32.mrb[0].mxu0
    %v1848 = vadd.f32 0.0, %v1847
    %v1849 = vpop.f32.mrb[0].mxu0
    %1850 = vdwg.mxu0
    %v1851 = vpack.c.bf16 %v1824, %v1821
    %v1852 = vpack.c.bf16 %v1832, %v1829
    %v1853 = vpack.c.bf16 %v1840, %v1837
    %v1854 = vpack.c.bf16 %v1848, %v1845
    %s1855 = scalar_lea.vmem [#allocation7], 32
    %v1856 = vld [vmem:[%s1855] sm:$0xf]
    %v1857 = vld [vmem:[%s1855 + $0x4] sm:$0xf]
    %v1858 = vld [vmem:[%s1855 + $0x8] sm:$0xf]
    %v1859 = vld [vmem:[%s1855 + $0xc] sm:$0xf]
    %v1860 = vld [vmem:[%s1855 + $0x10] sm:$0xf]
    %v1861 = vld [vmem:[%s1855 + $0x14] sm:$0xf]
    %v1862 = vld [vmem:[%s1855 + $0x18] sm:$0xf]
    %v1863 = vld [vmem:[%s1855 + $0x1c] sm:$0xf]
    %v1872 = vunpack.c.l.b16 %v1856
    %v1873 = vunpack.c.l.b16 %v1857
    %v1874 = vunpack.c.l.b16 %v1858
    %v1875 = vunpack.c.l.b16 %v1859
    %v1876 = vunpack.c.l.b16 %v1860
    %v1877 = vunpack.c.l.b16 %v1861
    %v1878 = vunpack.c.l.b16 %v1862
    %v1879 = vunpack.c.l.b16 %v1863
    %v1880 = vpack.c.b16 %v1873, %v1872
    %v1881 = vpack.c.b16 %v1875, %v1874
    %v1882 = vpack.c.b16 %v1877, %v1876
    %v1883 = vpack.c.b16 %v1879, %v1878
    %1888 = vmatprep.subr.bf16.mxu0 0
    %1889 = vmatpush1.bf16.msra.mxu0 %v1880
    %1890 = vmatprep.subr.bf16.mxu0 0
    %1891 = vmatpush1.bf16.msra.mxu0 %v1881
    %1892 = vmatprep.subr.bf16.mxu0 0
    %1893 = vmatpush1.bf16.msra.mxu0 %v1882
    %1894 = vmatprep.subr.bf16.mxu0 0
    %1895 = vmatpush1.bf16.msra.mxu0 %v1883
    %1896 = vmatprep.subr.bf16.mxu0 0
    %1897 = vmatpush1.bf16.msra.mxu0 0
    %1898 = vmatprep.subr.bf16.mxu0 0
    %1899 = vmatpush1.bf16.msra.mxu0 0
    %1900 = vmatprep.subr.bf16.mxu0 0
    %1901 = vmatpush1.bf16.msra.mxu0 0
    %1902 = vmatprep.subr.bf16.mxu0 0
    %1903 = vmatpush1.bf16.msra.mxu0 0
    %1904 = vmatprep.subr.bf16.mxu0 0
    %1905 = vmatpush1.bf16.msra.mxu0 0
    %1906 = vmatprep.subr.bf16.mxu0 0
    %1907 = vmatpush1.bf16.msra.mxu0 0
    %1908 = vmatprep.subr.bf16.mxu0 0
    %1909 = vmatpush1.bf16.msra.mxu0 0
    %1910 = vmatprep.subr.bf16.mxu0 0
    %1911 = vmatpush1.bf16.msra.mxu0 0
    %1912 = vmatprep.subr.bf16.mxu0 0
    %1913 = vmatpush1.bf16.msra.mxu0 0
    %1914 = vmatprep.subr.bf16.mxu0 0
    %1915 = vmatpush1.bf16.msra.mxu0 0
    %1916 = vmatprep.subr.bf16.mxu0 0
    %1917 = vmatpush1.bf16.msra.mxu0 0
    %1918 = vmatprep.subr.bf16.mxu0 0
    %1919 = vmatpush1.bf16.msra.mxu0 0
    %1920 = vmatprep.mubr.bf16.mxu0 0
    %1921 = vmatmul.mubr.bf16.gmra.mrb[0].mxu0 %v1775
    %v1922 = vpop.f32.mrb[0].mxu0
    %v1923 = vadd.f32 0.0, %v1922
    %v1924 = vpop.f32.mrb[0].mxu0
    %v1925 = vpop.f32.mrb[0].mxu0
    %v1926 = vadd.f32 0.0, %v1925
    %v1927 = vpop.f32.mrb[0].mxu0
    %1928 = vmatprep.mubr.bf16.mxu0 0
    %1929 = vmatmul.mubr.bf16.gmra.mrb[0].mxu0 %v1778
    %v1930 = vpop.f32.mrb[0].mxu0
    %v1931 = vadd.f32 0.0, %v1930
    %v1932 = vpop.f32.mrb[0].mxu0
    %v1933 = vpop.f32.mrb[0].mxu0
    %v1934 = vadd.f32 0.0, %v1933
    %v1935 = vpop.f32.mrb[0].mxu0
    %1936 = vmatprep.mubr.bf16.mxu0 0
    %1937 = vmatmul.mubr.bf16.gmra.mrb[0].mxu0 %v1781
    %v1938 = vpop.f32.mrb[0].mxu0
    %v1939 = vadd.f32 0.0, %v1938
    %v1940 = vpop.f32.mrb[0].mxu0
    %v1941 = vpop.f32.mrb[0].mxu0
    %v1942 = vadd.f32 0.0, %v1941
    %v1943 = vpop.f32.mrb[0].mxu0
    %1944 = vmatprep.mubr.bf16.mxu0 0
    %1945 = vmatmul.mubr.bf16.gmra.mrb[0].mxu0 %v1784
    %v1946 = vpop.f32.mrb[0].mxu0
    %v1947 = vadd.f32 0.0, %v1946
    %v1948 = vpop.f32.mrb[0].mxu0
    %v1949 = vpop.f32.mrb[0].mxu0
    %v1950 = vadd.f32 0.0, %v1949
    %v1951 = vpop.f32.mrb[0].mxu0
    %1952 = vdwg.mxu0
    %v1953 = vpack.c.bf16 %v1926, %v1923
    %v1954 = vpack.c.bf16 %v1934, %v1931
    %v1955 = vpack.c.bf16 %v1942, %v1939
    %v1956 = vpack.c.bf16 %v1950, %v1947
    %s1957 = scalar_lea.vmem [#allocation7], 64
    %v1958 = vld [vmem:[%s1957] sm:$0xf]
    %v1959 = vld [vmem:[%s1957 + $0x4] sm:$0xf]
    %v1960 = vld [vmem:[%s1957 + $0x8] sm:$0xf]
    %v1961 = vld [vmem:[%s1957 + $0xc] sm:$0xf]
    %v1962 = vld [vmem:[%s1957 + $0x10] sm:$0xf]
    %v1963 = vld [vmem:[%s1957 + $0x14] sm:$0xf]
    %v1964 = vld [vmem:[%s1957 + $0x18] sm:$0xf]
    %v1965 = vld [vmem:[%s1957 + $0x1c] sm:$0xf]
    %v1974 = vunpack.c.l.b16 %v1958
    %v1975 = vunpack.c.l.b16 %v1959
    %v1976 = vunpack.c.l.b16 %v1960
    %v1977 = vunpack.c.l.b16 %v1961
    %v1978 = vunpack.c.l.b16 %v1962
    %v1979 = vunpack.c.l.b16 %v1963
    %v1980 = vunpack.c.l.b16 %v1964
    %v1981 = vunpack.c.l.b16 %v1965
    %v1982 = vpack.c.b16 %v1975, %v1974
    %v1983 = vpack.c.b16 %v1977, %v1976
    %v1984 = vpack.c.b16 %v1979, %v1978
    %v1985 = vpack.c.b16 %v1981, %v1980
    %1990 = vmatprep.subr.bf16.mxu0 0
    %1991 = vmatpush1.bf16.msra.mxu0 %v1982
    %1992 = vmatprep.subr.bf16.mxu0 0
    %1993 = vmatpush1.bf16.msra.mxu0 %v1983
    %1994 = vmatprep.subr.bf16.mxu0 0
    %1995 = vmatpush1.bf16.msra.mxu0 %v1984
    %1996 = vmatprep.subr.bf16.mxu0 0
    %1997 = vmatpush1.bf16.msra.mxu0 %v1985
    %1998 = vmatprep.subr.bf16.mxu0 0
    %1999 = vmatpush1.bf16.msra.mxu0 0
    %2000 = vmatprep.subr.bf16.mxu0 0
    %2001 = vmatpush1.bf16.msra.mxu0 0
    %2002 = vmatprep.subr.bf16.mxu0 0
    %2003 = vmatpush1.bf16.msra.mxu0 0
    %2004 = vmatprep.subr.bf16.mxu0 0
    %2005 = vmatpush1.bf16.msra.mxu0 0
    %2006 = vmatprep.subr.bf16.mxu0 0
    %2007 = vmatpush1.bf16.msra.mxu0 0
    %2008 = vmatprep.subr.bf16.mxu0 0
    %2009 = vmatpush1.bf16.msra.mxu0 0
    %2010 = vmatprep.subr.bf16.mxu0 0
    %2011 = vmatpush1.bf16.msra.mxu0 0
    %2012 = vmatprep.subr.bf16.mxu0 0
    %2013 = vmatpush1.bf16.msra.mxu0 0
    %2014 = vmatprep.subr.bf16.mxu0 0
    %2015 = vmatpush1.bf16.msra.mxu0 0
    %2016 = vmatprep.subr.bf16.mxu0 0
    %2017 = vmatpush1.bf16.msra.mxu0 0
    %2018 = vmatprep.subr.bf16.mxu0 0
    %2019 = vmatpush1.bf16.msra.mxu0 0
    %2020 = vmatprep.subr.bf16.mxu0 0
    %2021 = vmatpush1.bf16.msra.mxu0 0
    %2022 = vmatprep.mubr.bf16.mxu0 0
    %2023 = vmatmul.mubr.bf16.gmra.mrb[0].mxu0 %v1775
    %v2024 = vpop.f32.mrb[0].mxu0
    %v2025 = vadd.f32 0.0, %v2024
    %v2026 = vpop.f32.mrb[0].mxu0
    %v2027 = vpop.f32.mrb[0].mxu0
    %v2028 = vadd.f32 0.0, %v2027
    %v2029 = vpop.f32.mrb[0].mxu0
    %2030 = vmatprep.mubr.bf16.mxu0 0
    %2031 = vmatmul.mubr.bf16.gmra.mrb[0].mxu0 %v1778
    %v2032 = vpop.f32.mrb[0].mxu0
    %v2033 = vadd.f32 0.0, %v2032
    %v2034 = vpop.f32.mrb[0].mxu0
    %v2035 = vpop.f32.mrb[0].mxu0
    %v2036 = vadd.f32 0.0, %v2035
    %v2037 = vpop.f32.mrb[0].mxu0
    %2038 = vmatprep.mubr.bf16.mxu0 0
    %2039 = vmatmul.mubr.bf16.gmra.mrb[0].mxu0 %v1781
    %v2040 = vpop.f32.mrb[0].mxu0
    %v2041 = vadd.f32 0.0, %v2040
    %v2042 = vpop.f32.mrb[0].mxu0
    %v2043 = vpop.f32.mrb[0].mxu0
    %v2044 = vadd.f32 0.0, %v2043
    %v2045 = vpop.f32.mrb[0].mxu0
    %2046 = vmatprep.mubr.bf16.mxu0 0
    %2047 = vmatmul.mubr.bf16.gmra.mrb[0].mxu0 %v1784
    %v2048 = vpop.f32.mrb[0].mxu0
    %v2049 = vadd.f32 0.0, %v2048
    %v2050 = vpop.f32.mrb[0].mxu0
    %v2051 = vpop.f32.mrb[0].mxu0
    %v2052 = vadd.f32 0.0, %v2051
    %v2053 = vpop.f32.mrb[0].mxu0
    %2054 = vdwg.mxu0
    %v2055 = vpack.c.bf16 %v2028, %v2025
    %v2056 = vpack.c.bf16 %v2036, %v2033
    %v2057 = vpack.c.bf16 %v2044, %v2041
    %v2058 = vpack.c.bf16 %v2052, %v2049
    %v2059 = vld [vmem:[%s10] sm:$0xff]
    %v2060 = vld [vmem:[%s10 + $0x8] sm:$0xff]
    %v2061 = vld [vmem:[%s10 + $0x10] sm:$0xff]
    %v2062 = vld [vmem:[%s10 + $0x18] sm:$0xff]
    %v2063 = vld [vmem:[%s10 + $0x20] sm:$0xff]
    %v2064 = vld [vmem:[%s10 + $0x28] sm:$0xff]
    %v2065 = vld [vmem:[%s10 + $0x30] sm:$0xff]
    %v2066 = vld [vmem:[%s10 + $0x38] sm:$0xff]
    %v2067 = vld [vmem:[%s10 + $0x40] sm:$0xff]
    %v2068 = vld [vmem:[%s10 + $0x48] sm:$0xff]
    %v2069 = vld [vmem:[%s10 + $0x50] sm:$0xff]
    %v2070 = vld [vmem:[%s10 + $0x58] sm:$0xff]
    %v2071 = vld [vmem:[%s10 + $0x60] sm:$0xff]
    %v2072 = vld [vmem:[%s10 + $0x68] sm:$0xff]
    %v2073 = vld [vmem:[%s10 + $0x70] sm:$0xff]
    %v2074 = vld [vmem:[%s10 + $0x78] sm:$0xff]
    %v2075 = vld [vmem:[%s10 + $0x80] sm:$0xff]
    %v2076 = vld [vmem:[%s10 + $0x88] sm:$0xff]
    %v2077 = vld [vmem:[%s10 + $0x90] sm:$0xff]
    %v2078 = vld [vmem:[%s10 + $0x98] sm:$0xff]
    %v2079 = vld [vmem:[%s10 + $0xa0] sm:$0xff]
    %v2080 = vld [vmem:[%s10 + $0xa8] sm:$0xff]
    %v2081 = vld [vmem:[%s10 + $0xb0] sm:$0xff]
    %v2082 = vld [vmem:[%s10 + $0xb8] sm:$0xff]
    %v2083 = vld [vmem:[%s15] sm:$0xff]
    %v2084 = vld [vmem:[%s15 + $0x8] sm:$0xff]
    %v2085 = vld [vmem:[%s15 + $0x10] sm:$0xff]
    %v2086 = vld [vmem:[%s15 + $0x18] sm:$0xff]
    %v2087 = vld [vmem:[%s15 + $0x20] sm:$0xff]
    %v2088 = vld [vmem:[%s15 + $0x28] sm:$0xff]
    %v2089 = vld [vmem:[%s15 + $0x30] sm:$0xff]
    %v2090 = vld [vmem:[%s15 + $0x38] sm:$0xff]
    %v2091 = vld [vmem:[%s15 + $0x40] sm:$0xff]
    %v2092 = vld [vmem:[%s15 + $0x48] sm:$0xff]
    %v2093 = vld [vmem:[%s15 + $0x50] sm:$0xff]
    %v2094 = vld [vmem:[%s15 + $0x58] sm:$0xff]
    %v2095 = vld [vmem:[%s15 + $0x60] sm:$0xff]
    %v2096 = vld [vmem:[%s15 + $0x68] sm:$0xff]
    %v2097 = vld [vmem:[%s15 + $0x70] sm:$0xff]
    %v2098 = vld [vmem:[%s15 + $0x78] sm:$0xff]
    %v2099 = vld [vmem:[%s15 + $0x80] sm:$0xff]
    %v2100 = vld [vmem:[%s15 + $0x88] sm:$0xff]
    %v2101 = vld [vmem:[%s15 + $0x90] sm:$0xff]
    %v2102 = vld [vmem:[%s15 + $0x98] sm:$0xff]
    %v2103 = vld [vmem:[%s15 + $0xa0] sm:$0xff]
    %v2104 = vld [vmem:[%s15 + $0xa8] sm:$0xff]
    %v2105 = vld [vmem:[%s15 + $0xb0] sm:$0xff]
    %v2106 = vld [vmem:[%s15 + $0xb8] sm:$0xff]
    %v2131 = vunpack.c.l.b16 %v2059
    %v2132 = vunpack.c.h.b16 %v2059
    %v2133 = vunpack.c.l.b16 %v2060
    %v2134 = vunpack.c.h.b16 %v2060
    %v2135 = vunpack.c.l.b16 %v2061
    %v2136 = vunpack.c.h.b16 %v2061
    %v2137 = vunpack.c.l.b16 %v2062
    %v2138 = vunpack.c.h.b16 %v2062
    %v2139 = vunpack.c.l.b16 %v2063
    %v2140 = vunpack.c.h.b16 %v2063
    %v2141 = vunpack.c.l.b16 %v2064
    %v2142 = vunpack.c.h.b16 %v2064
    %v2143 = vunpack.c.l.b16 %v2065
    %v2144 = vunpack.c.h.b16 %v2065
    %v2145 = vunpack.c.l.b16 %v2066
    %v2146 = vunpack.c.h.b16 %v2066
    %v2147 = vunpack.c.l.b16 %v2067
    %v2148 = vunpack.c.h.b16 %v2067
    %v2149 = vunpack.c.l.b16 %v2068
    %v2150 = vunpack.c.h.b16 %v2068
    %v2151 = vunpack.c.l.b16 %v2069
    %v2152 = vunpack.c.h.b16 %v2069
    %v2153 = vunpack.c.l.b16 %v2070
    %v2154 = vunpack.c.h.b16 %v2070
    %v2155 = vunpack.c.l.b16 %v2071
    %v2156 = vunpack.c.h.b16 %v2071
    %v2157 = vunpack.c.l.b16 %v2072
    %v2158 = vunpack.c.h.b16 %v2072
    %v2159 = vunpack.c.l.b16 %v2073
    %v2160 = vunpack.c.h.b16 %v2073
    %v2161 = vunpack.c.l.b16 %v2074
    %v2162 = vunpack.c.h.b16 %v2074
    %v2163 = vunpack.c.l.b16 %v2075
    %v2164 = vunpack.c.h.b16 %v2075
    %v2165 = vunpack.c.l.b16 %v2076
    %v2166 = vunpack.c.h.b16 %v2076
    %v2167 = vunpack.c.l.b16 %v2077
    %v2168 = vunpack.c.h.b16 %v2077
    %v2169 = vunpack.c.l.b16 %v2078
    %v2170 = vunpack.c.h.b16 %v2078
    %v2171 = vunpack.c.l.b16 %v2079
    %v2172 = vunpack.c.h.b16 %v2079
    %v2173 = vunpack.c.l.b16 %v2080
    %v2174 = vunpack.c.h.b16 %v2080
    %v2175 = vunpack.c.l.b16 %v2081
    %v2176 = vunpack.c.h.b16 %v2081
    %v2177 = vunpack.c.l.b16 %v2082
    %v2178 = vunpack.c.h.b16 %v2082
    %v2179 = vpack.c.b16 %v2133, %v2131
    %v2180 = vpack.c.b16 %v2134, %v2132
    %v2181 = vpack.c.b16 %v2137, %v2135
    %v2182 = vpack.c.b16 %v2138, %v2136
    %v2183 = vpack.c.b16 %v2141, %v2139
    %v2184 = vpack.c.b16 %v2142, %v2140
    %v2185 = vpack.c.b16 %v2145, %v2143
    %v2186 = vpack.c.b16 %v2146, %v2144
    %v2187 = vpack.c.b16 %v2149, %v2147
    %v2188 = vpack.c.b16 %v2150, %v2148
    %v2189 = vpack.c.b16 %v2153, %v2151
    %v2190 = vpack.c.b16 %v2154, %v2152
    %v2191 = vpack.c.b16 %v2157, %v2155
    %v2192 = vpack.c.b16 %v2158, %v2156
    %v2193 = vpack.c.b16 %v2161, %v2159
    %v2194 = vpack.c.b16 %v2162, %v2160
    %v2195 = vpack.c.b16 %v2165, %v2163
    %v2196 = vpack.c.b16 %v2166, %v2164
    %v2197 = vpack.c.b16 %v2169, %v2167
    %v2198 = vpack.c.b16 %v2170, %v2168
    %v2199 = vpack.c.b16 %v2173, %v2171
    %v2200 = vpack.c.b16 %v2174, %v2172
    %v2201 = vpack.c.b16 %v2177, %v2175
    %v2202 = vpack.c.b16 %v2178, %v2176
    %v2216 = vsel %vm478, %v2180, 0
    %v2219 = vsel %vm478, %v2182, 0
    %v2222 = vsel %vm478, %v2184, 0
    %v2225 = vsel %vm478, %v2186, 0
    %v2228 = vsel %vm478, %v2188, 0
    %v2231 = vsel %vm478, %v2190, 0
    %v2234 = vsel %vm478, %v2192, 0
    %v2237 = vsel %vm478, %v2194, 0
    %v2240 = vsel %vm478, %v2196, 0
    %v2243 = vsel %vm478, %v2198, 0
    %v2246 = vsel %vm478, %v2200, 0
    %v2249 = vsel %vm478, %v2202, 0
    %2251 = vmatprep.subr.bf16.mxu0 0
    %2252 = vmatpush1.bf16.msra.mxu0 %v1851
    %2253 = vmatprep.subr.bf16.mxu0 0
    %2254 = vmatpush1.bf16.msra.mxu0 %v1852
    %2255 = vmatprep.subr.bf16.mxu0 0
    %2256 = vmatpush1.bf16.msra.mxu0 %v1853
    %2257 = vmatprep.subr.bf16.mxu0 0
    %2258 = vmatpush1.bf16.msra.mxu0 %v1854
    %2259 = vmatprep.subr.bf16.mxu0 0
    %2260 = vmatpush1.bf16.msra.mxu0 %v1953
    %2261 = vmatprep.subr.bf16.mxu0 0
    %2262 = vmatpush1.bf16.msra.mxu0 %v1954
    %2263 = vmatprep.subr.bf16.mxu0 0
    %2264 = vmatpush1.bf16.msra.mxu0 %v1955
    %2265 = vmatprep.subr.bf16.mxu0 0
    %2266 = vmatpush1.bf16.msra.mxu0 %v1956
    %2267 = vmatprep.subr.bf16.mxu0 0
    %2268 = vmatpush1.bf16.msra.mxu0 %v2055
    %2269 = vmatprep.subr.bf16.mxu0 0
    %2270 = vmatpush1.bf16.msra.mxu0 %v2056
    %2271 = vmatprep.subr.bf16.mxu0 0
    %2272 = vmatpush1.bf16.msra.mxu0 %v2057
    %2273 = vmatprep.subr.bf16.mxu0 0
    %2274 = vmatpush1.bf16.msra.mxu0 %v2058
    %2275 = vmatprep.subr.bf16.mxu0 0
    %2276 = vmatpush1.bf16.msra.mxu0 0
    %2277 = vmatprep.subr.bf16.mxu0 0
    %2278 = vmatpush1.bf16.msra.mxu0 0
    %2279 = vmatprep.subr.bf16.mxu0 0
    %2280 = vmatpush1.bf16.msra.mxu0 0
    %2281 = vmatprep.subr.bf16.mxu0 0
    %2282 = vmatpush1.bf16.msra.mxu0 0
    %2283 = vmatprep.mubr.bf16.mxu0 %v2216
    %2284 = vmatmul.mubr.bf16.gmra.mrb[0].mxu0 %v2179
    %v2285 = vpop.f32.mrb[0].mxu0
    %v2286 = vadd.f32 %v2083, %v2285
    %v2287 = vpop.f32.mrb[0].mxu0
    %v2288 = vpop.f32.mrb[0].mxu0
    %v2289 = vadd.f32 %v2084, %v2288
    %v2290 = vpop.f32.mrb[0].mxu0
    %2291 = vmatprep.mubr.bf16.mxu0 %v2219
    %2292 = vmatmul.mubr.bf16.gmra.mrb[0].mxu0 %v2181
    %v2293 = vpop.f32.mrb[0].mxu0
    %v2294 = vadd.f32 %v2085, %v2293
    %v2295 = vpop.f32.mrb[0].mxu0
    %v2296 = vpop.f32.mrb[0].mxu0
    %v2297 = vadd.f32 %v2086, %v2296
    %v2298 = vpop.f32.mrb[0].mxu0
    %2299 = vmatprep.mubr.bf16.mxu0 %v2222
    %2300 = vmatmul.mubr.bf16.gmra.mrb[0].mxu0 %v2183
    %v2301 = vpop.f32.mrb[0].mxu0
    %v2302 = vadd.f32 %v2087, %v2301
    %v2303 = vpop.f32.mrb[0].mxu0
    %v2304 = vpop.f32.mrb[0].mxu0
    %v2305 = vadd.f32 %v2088, %v2304
    %v2306 = vpop.f32.mrb[0].mxu0
    %2307 = vmatprep.mubr.bf16.mxu0 %v2225
    %2308 = vmatmul.mubr.bf16.gmra.mrb[0].mxu0 %v2185
    %v2309 = vpop.f32.mrb[0].mxu0
    %v2310 = vadd.f32 %v2089, %v2309
    %v2311 = vpop.f32.mrb[0].mxu0
    %v2312 = vpop.f32.mrb[0].mxu0
    %v2313 = vadd.f32 %v2090, %v2312
    %v2314 = vpop.f32.mrb[0].mxu0
    %2315 = vmatprep.mubr.bf16.mxu0 %v2228
    %2316 = vmatmul.mubr.bf16.gmra.mrb[0].mxu0 %v2187
    %v2317 = vpop.f32.mrb[0].mxu0
    %v2318 = vadd.f32 %v2091, %v2317
    %v2319 = vpop.f32.mrb[0].mxu0
    %v2320 = vpop.f32.mrb[0].mxu0
    %v2321 = vadd.f32 %v2092, %v2320
    %v2322 = vpop.f32.mrb[0].mxu0
    %2323 = vmatprep.mubr.bf16.mxu0 %v2231
    %2324 = vmatmul.mubr.bf16.gmra.mrb[0].mxu0 %v2189
    %v2325 = vpop.f32.mrb[0].mxu0
    %v2326 = vadd.f32 %v2093, %v2325
    %v2327 = vpop.f32.mrb[0].mxu0
    %v2328 = vpop.f32.mrb[0].mxu0
    %v2329 = vadd.f32 %v2094, %v2328
    %v2330 = vpop.f32.mrb[0].mxu0
    %2331 = vmatprep.mubr.bf16.mxu0 %v2234
    %2332 = vmatmul.mubr.bf16.gmra.mrb[0].mxu0 %v2191
    %v2333 = vpop.f32.mrb[0].mxu0
    %v2334 = vadd.f32 %v2095, %v2333
    %v2335 = vpop.f32.mrb[0].mxu0
    %v2336 = vpop.f32.mrb[0].mxu0
    %v2337 = vadd.f32 %v2096, %v2336
    %v2338 = vpop.f32.mrb[0].mxu0
    %2339 = vmatprep.mubr.bf16.mxu0 %v2237
    %2340 = vmatmul.mubr.bf16.gmra.mrb[0].mxu0 %v2193
    %v2341 = vpop.f32.mrb[0].mxu0
    %v2342 = vadd.f32 %v2097, %v2341
    %v2343 = vpop.f32.mrb[0].mxu0
    %v2344 = vpop.f32.mrb[0].mxu0
    %v2345 = vadd.f32 %v2098, %v2344
    %v2346 = vpop.f32.mrb[0].mxu0
    %2347 = vmatprep.mubr.bf16.mxu0 %v2240
    %2348 = vmatmul.mubr.bf16.gmra.mrb[0].mxu0 %v2195
    %v2349 = vpop.f32.mrb[0].mxu0
    %v2350 = vadd.f32 %v2099, %v2349
    %v2351 = vpop.f32.mrb[0].mxu0
    %v2352 = vpop.f32.mrb[0].mxu0
    %v2353 = vadd.f32 %v2100, %v2352
    %v2354 = vpop.f32.mrb[0].mxu0
    %2355 = vmatprep.mubr.bf16.mxu0 %v2243
    %2356 = vmatmul.mubr.bf16.gmra.mrb[0].mxu0 %v2197
    %v2357 = vpop.f32.mrb[0].mxu0
    %v2358 = vadd.f32 %v2101, %v2357
    %v2359 = vpop.f32.mrb[0].mxu0
    %v2360 = vpop.f32.mrb[0].mxu0
    %v2361 = vadd.f32 %v2102, %v2360
    %v2362 = vpop.f32.mrb[0].mxu0
    %2363 = vmatprep.mubr.bf16.mxu0 %v2246
    %2364 = vmatmul.mubr.bf16.gmra.mrb[0].mxu0 %v2199
    %v2365 = vpop.f32.mrb[0].mxu0
    %v2366 = vadd.f32 %v2103, %v2365
    %v2367 = vpop.f32.mrb[0].mxu0
    %v2368 = vpop.f32.mrb[0].mxu0
    %v2369 = vadd.f32 %v2104, %v2368
    %v2370 = vpop.f32.mrb[0].mxu0
    %2371 = vmatprep.mubr.bf16.mxu0 %v2249
    %2372 = vmatmul.mubr.bf16.gmra.mrb[0].mxu0 %v2201
    %v2373 = vpop.f32.mrb[0].mxu0
    %v2374 = vadd.f32 %v2105, %v2373
    %v2375 = vpop.f32.mrb[0].mxu0
    %v2376 = vpop.f32.mrb[0].mxu0
    %v2377 = vadd.f32 %v2106, %v2376
    %v2378 = vpop.f32.mrb[0].mxu0
    %2379 = vdwg.mxu0
    %2380 = vst [vmem:[%s16] sm:$0xff] %v2286
    %2381 = vst [vmem:[%s16 + $0x8] sm:$0xff] %v2289
    %2382 = vst [vmem:[%s16 + $0x10] sm:$0xff] %v2294
    %2383 = vst [vmem:[%s16 + $0x18] sm:$0xff] %v2297
    %2384 = vst [vmem:[%s16 + $0x20] sm:$0xff] %v2302
    %2385 = vst [vmem:[%s16 + $0x28] sm:$0xff] %v2305
    %2386 = vst [vmem:[%s16 + $0x30] sm:$0xff] %v2310
    %2387 = vst [vmem:[%s16 + $0x38] sm:$0xff] %v2313
    %2388 = vst [vmem:[%s16 + $0x40] sm:$0xff] %v2318
    %2389 = vst [vmem:[%s16 + $0x48] sm:$0xff] %v2321
    %2390 = vst [vmem:[%s16 + $0x50] sm:$0xff] %v2326
    %2391 = vst [vmem:[%s16 + $0x58] sm:$0xff] %v2329
    %2392 = vst [vmem:[%s16 + $0x60] sm:$0xff] %v2334
    %2393 = vst [vmem:[%s16 + $0x68] sm:$0xff] %v2337
    %2394 = vst [vmem:[%s16 + $0x70] sm:$0xff] %v2342
    %2395 = vst [vmem:[%s16 + $0x78] sm:$0xff] %v2345
    %2396 = vst [vmem:[%s16 + $0x80] sm:$0xff] %v2350
    %2397 = vst [vmem:[%s16 + $0x88] sm:$0xff] %v2353
    %2398 = vst [vmem:[%s16 + $0x90] sm:$0xff] %v2358
    %2399 = vst [vmem:[%s16 + $0x98] sm:$0xff] %v2361
    %2400 = vst [vmem:[%s16 + $0xa0] sm:$0xff] %v2366
    %2401 = vst [vmem:[%s16 + $0xa8] sm:$0xff] %v2369
    %2402 = vst [vmem:[%s16 + $0xb0] sm:$0xff] %v2374
    %2403 = vst [vmem:[%s16 + $0xb8] sm:$0xff] %v2377
    // Predicated region
    $region98: #{decoder_forward.1} parent=1 // pred_check
      _
    $region99: #{decoder_forward.1} parent=1 // pred_check_branch
      %2405 = sbr.rel (0) target = $region101
    $region100: #{decoder_forward.1} parent=1 // pred_region
      _
    $region101: #{decoder_forward.1} parent=1 // pred_fallthru
      _
    // Predicated region
    $region102: #{decoder_forward.1} parent=1 // pred_check
      _
    $region103: #{decoder_forward.1} parent=1 // pred_check_branch
      %2407 = sbr.rel (0) target = $region105
    $region104: #{decoder_forward.1} parent=1 // pred_region
      _
    $region105: #{decoder_forward.1} parent=1 // pred_fallthru
      _
    %2408 = vsyncpa [#allocation3], 1
    %2409 = vsyncpa [#allocation5], 1
    %2410 = vsyncpa [#allocation8], 1
    %2411 = vsyncpa [#allocation11], 1
    %2412 = vsyncpa [#allocation14], 1

</llo_original>
